<compile_context>
chip_gen: v7x
topology: tpu7x:2x2x1
jax: 0.10.0
libtpu: 0.0.40
codegen_flags: <defaults>
</compile_context>

<pallas_src>
import functools

import jax
import jax.numpy as jnp
from jax.experimental import pallas as pl
from jax.experimental.pallas import tpu as pltpu


def discriminator_kernel(z_ref,
                         w1_ref, b1_ref,
                         w2_ref, b2_ref,
                         w3_ref, b3_ref,
                         w4_ref, b4_ref,
                         w5_ref, b5_ref,
                         out_ref):
    """One batch tile of the full MLP forward.

    All matmuls run the native bf16 x bf16 -> f32 MXU path (f32 accumulation);
    bias-add + ReLU on the VPU in f32; final layer is a VPU multiply + row
    reduction; sigmoid exp/reciprocal hits the EUP.
    """
    f32 = jnp.float32
    bf16 = jnp.bfloat16

    # layer 1: Linear(nz, ndf) + ReLU   (z arrives already in bf16)
    h = jnp.dot(z_ref[...], w1_ref[...], preferred_element_type=f32)
    h = jnp.maximum(h + b1_ref[...], 0.0)

    # layers 2-4: Linear(ndf, ndf) + ReLU
    h = jnp.dot(h.astype(bf16), w2_ref[...], preferred_element_type=f32)
    h = jnp.maximum(h + b2_ref[...], 0.0)
    h = jnp.dot(h.astype(bf16), w3_ref[...], preferred_element_type=f32)
    h = jnp.maximum(h + b3_ref[...], 0.0)
    h = jnp.dot(h.astype(bf16), w4_ref[...], preferred_element_type=f32)
    h = jnp.maximum(h + b4_ref[...], 0.0)

    # layer 5: Linear(ndf, 1) + Sigmoid.
    # N=1 matmul would waste an MXU pass -> VPU multiply + row-reduce (XLU).
    w5 = w5_ref[...].astype(f32)                          # (1, ndf), tiny cast
    logit = jnp.sum(h * w5, axis=-1, keepdims=True) + b5_ref[...]
    out_ref[...] = pl.reciprocal(1.0 + jnp.exp(-logit), approx=True)


def _round_up(x, m):
    return ((x + m - 1) // m) * m


@functools.partial(jax.jit, static_argnames=("block_b",))
def discriminator_forward(z, params, *, block_b=512):
    """z: (B, nz) float32.
    params: 5 tuples (W, b); W stored as (in, out) in bf16 (w5 as (1, ndf)),
    biases as (1, out) in f32.  Returns (B, 1) float32.
    """
    B, nz = z.shape
    (w1, b1), (w2, b2), (w3, b3), (w4, b4), (w5, b5) = params

    # Feed z in bf16: halves the activation DMA and matches the bf16 MXU path.
    z = z.astype(jnp.bfloat16)

    # Batch tile: 16-aligned (bf16 sublane packing), capped at block_b, and
    # split so n_blocks >= 2 when B permits -> the "parallel" grid axis can
    # shard across both TensorCores on v7x (no-op on single-TC v5e/v6e).
    tb = min(block_b, max(16, _round_up(pl.cdiv(B, 2), 16)))
    tb = _round_up(tb, 16)
    n_blocks = pl.cdiv(B, tb)
    b_pad = n_blocks * tb
    if b_pad != B:
        z = jnp.pad(z, ((0, b_pad - B), (0, 0)))

    # Batch-blocked input/output; weights/biases fully resident (constant map).
    z_spec = pl.BlockSpec((tb, nz), lambda i: (i, 0))
    out_spec = pl.BlockSpec((tb, 1), lambda i: (i, 0))

    def resident(shape):
        return pl.BlockSpec(shape, lambda i: (0, 0))

    in_specs = [
        z_spec,
        resident(w1.shape), resident(b1.shape),
        resident(w2.shape), resident(b2.shape),
        resident(w3.shape), resident(b3.shape),
        resident(w4.shape), resident(b4.shape),
        resident(w5.shape), resident(b5.shape),
    ]

    out = pl.pallas_call(
        discriminator_kernel,
        out_shape=jax.ShapeDtypeStruct((b_pad, 1), jnp.float32),
        grid=(n_blocks,),
        in_specs=in_specs,
        out_specs=out_spec,
        compiler_params=pltpu.CompilerParams(
            dimension_semantics=("parallel",)),
    )(z, w1, b1, w2, b2, w3, b3, w4, b4, w5, b5)

    return out[:B]


def init_params(key, nz=64, ndf=512):
    """Deterministic synthetic parameters (PyTorch-default-ish uniform init).

    Weights are returned in bf16 (layout (in, out); last layer pre-transposed
    to (1, ndf) for the in-kernel row reduction); biases stay f32 as (1, out).
    """
    dims = [(nz, ndf), (ndf, ndf), (ndf, ndf), (ndf, ndf), (ndf, 1)]
    params = []
    for li, (fan_in, fan_out) in enumerate(dims):
        key, kw, kb = jax.random.split(key, 3)
        bound = 1.0 / jnp.sqrt(jnp.float32(fan_in))
        W = jax.random.uniform(kw, (fan_in, fan_out), jnp.float32, -bound, bound)
        b = jax.random.uniform(kb, (1, fan_out), jnp.float32, -bound, bound)
        if li == len(dims) - 1:
            W = W.T                      # (1, ndf) for VPU multiply + reduce
        params.append((W.astype(jnp.bfloat16), b))
    return tuple(params)


def reference_forward(z, params):
    """Pure-JAX reference of the same MLP (same bf16-rounded weights/inputs;
    activations kept in f32 — the kernel's bf16 activation rounding plus the
    approx reciprocal stay well inside the 5e-3 tolerance)."""
    (w1, b1), (w2, b2), (w3, b3), (w4, b4), (w5, b5) = params
    h = z.astype(jnp.bfloat16).astype(jnp.float32)
    for (W, b) in ((w1, b1), (w2, b2), (w3, b3), (w4, b4)):
        h = jnp.maximum(h @ W.astype(jnp.float32) + b, 0.0)
    logit = h @ w5.astype(jnp.float32).T + b5
    return jax.nn.sigmoid(logit)


if __name__ == "__main__":
    key = jax.random.PRNGKey(0)
    key, kz = jax.random.split(key)

    B, NZ, NDF = 8, 64, 512
    z = jax.random.normal(kz, (B, NZ), dtype=jnp.float32)
    params = init_params(key, nz=NZ, ndf=NDF)

    out = discriminator_forward(z, params)
    out = jax.block_until_ready(out)
    ref = reference_forward(z, params)
    assert out.shape == (B, 1), out.shape
    assert jnp.allclose(out, ref, atol=5e-3, rtol=5e-3), (out, ref)

    # Exercise the multi-block grid + padding path too (B not a tile multiple).
    key, kz2 = jax.random.split(key)
    B2 = 200
    z2 = jax.random.normal(kz2, (B2, NZ), dtype=jnp.float32)
    out2 = jax.block_until_ready(discriminator_forward(z2, params))
    ref2 = reference_forward(z2, params)
    assert out2.shape == (B2, 1), out2.shape
    assert jnp.allclose(out2, ref2, atol=5e-3, rtol=5e-3)

    print("KERNEL_OK")
</pallas_src>

<mosaic_0001>
module attributes {stable_mosaic.version = 11 : i64} {
  func.func @discriminator_kernel(%arg0: i32, %arg1: memref<16x64xbf16, #tpu.memory_space<vmem>>, %arg2: memref<64x512xbf16, #tpu.memory_space<vmem>>, %arg3: memref<1x512xf32, #tpu.memory_space<vmem>>, %arg4: memref<512x512xbf16, #tpu.memory_space<vmem>>, %arg5: memref<1x512xf32, #tpu.memory_space<vmem>>, %arg6: memref<512x512xbf16, #tpu.memory_space<vmem>>, %arg7: memref<1x512xf32, #tpu.memory_space<vmem>>, %arg8: memref<512x512xbf16, #tpu.memory_space<vmem>>, %arg9: memref<1x512xf32, #tpu.memory_space<vmem>>, %arg10: memref<1x512xbf16, #tpu.memory_space<vmem>>, %arg11: memref<1x1xf32, #tpu.memory_space<vmem>>, %arg12: memref<16x1xf32, #tpu.memory_space<vmem>>) attributes {dimension_semantics = [#tpu.dimension_semantics<parallel>], iteration_bounds = array<i64: 1>, scalar_prefetch = 0 : i64, scratch_operands = 0 : i64, tpu.core_type = #tpu.core_type<tc>, window_params = [{transform_indices = @transform_0, window_bounds = array<i64: 16, 64>}, {pipeline_mode = #tpu.pipeline_mode<synchronous>, transform_indices = @transform_1, window_bounds = array<i64: 64, 512>}, {pipeline_mode = #tpu.pipeline_mode<synchronous>, transform_indices = @transform_2, window_bounds = array<i64: 1, 512>}, {pipeline_mode = #tpu.pipeline_mode<synchronous>, transform_indices = @transform_3, window_bounds = array<i64: 512, 512>}, {pipeline_mode = #tpu.pipeline_mode<synchronous>, transform_indices = @transform_4, window_bounds = array<i64: 1, 512>}, {pipeline_mode = #tpu.pipeline_mode<synchronous>, transform_indices = @transform_5, window_bounds = array<i64: 512, 512>}, {pipeline_mode = #tpu.pipeline_mode<synchronous>, transform_indices = @transform_6, window_bounds = array<i64: 1, 512>}, {pipeline_mode = #tpu.pipeline_mode<synchronous>, transform_indices = @transform_7, window_bounds = array<i64: 512, 512>}, {pipeline_mode = #tpu.pipeline_mode<synchronous>, transform_indices = @transform_8, window_bounds = array<i64: 1, 512>}, {pipeline_mode = #tpu.pipeline_mode<synchronous>, transform_indices = @transform_9, window_bounds = array<i64: 1, 512>}, {pipeline_mode = #tpu.pipeline_mode<synchronous>, transform_indices = @transform_10, window_bounds = array<i64: 1, 1>}, {transform_indices = @transform_11, window_bounds = array<i64: 16, 1>}]} {
    %c0 = arith.constant 0 : index
    %c0_0 = arith.constant 0 : index
    %0 = vector.load %arg1[%c0, %c0_0] : memref<16x64xbf16, #tpu.memory_space<vmem>>, vector<16x64xbf16>
    %c0_1 = arith.constant 0 : index
    %c0_2 = arith.constant 0 : index
    %1 = vector.load %arg2[%c0_1, %c0_2] : memref<64x512xbf16, #tpu.memory_space<vmem>>, vector<64x512xbf16>
    %cst = arith.constant dense<0.000000e+00> : vector<16x512xf32>
    %2 = tpu.matmul %0, %1, %cst {dimension_numbers = #tpu.dot_dimension_numbers<[1], [0], [0], [1], [0, 0, 1, 1], [], []>} : vector<16x64xbf16>, vector<64x512xbf16>, vector<16x512xf32> -> vector<16x512xf32>
    %c0_3 = arith.constant 0 : index
    %c0_4 = arith.constant 0 : index
    %3 = vector.load %arg3[%c0_3, %c0_4] : memref<1x512xf32, #tpu.memory_space<vmem>>, vector<1x512xf32>
    %4 = vector.broadcast %3 : vector<1x512xf32> to vector<16x512xf32>
    %5 = arith.addf %2, %4 : vector<16x512xf32>
    %cst_5 = arith.constant 0.000000e+00 : f32
    %6 = vector.broadcast %cst_5 : f32 to vector<16x512xf32>
    %7 = arith.maximumf %5, %6 : vector<16x512xf32>
    %8 = arith.truncf %7 : vector<16x512xf32> to vector<16x512xbf16>
    %c0_6 = arith.constant 0 : index
    %c0_7 = arith.constant 0 : index
    %9 = vector.load %arg4[%c0_6, %c0_7] : memref<512x512xbf16, #tpu.memory_space<vmem>>, vector<512x512xbf16>
    %cst_8 = arith.constant dense<0.000000e+00> : vector<16x512xf32>
    %10 = tpu.matmul %8, %9, %cst_8 {dimension_numbers = #tpu.dot_dimension_numbers<[1], [0], [0], [1], [0, 0, 1, 1], [], []>} : vector<16x512xbf16>, vector<512x512xbf16>, vector<16x512xf32> -> vector<16x512xf32>
    %c0_9 = arith.constant 0 : index
    %c0_10 = arith.constant 0 : index
    %11 = vector.load %arg5[%c0_9, %c0_10] : memref<1x512xf32, #tpu.memory_space<vmem>>, vector<1x512xf32>
    %12 = vector.broadcast %11 : vector<1x512xf32> to vector<16x512xf32>
    %13 = arith.addf %10, %12 : vector<16x512xf32>
    %cst_11 = arith.constant 0.000000e+00 : f32
    %14 = vector.broadcast %cst_11 : f32 to vector<16x512xf32>
    %15 = arith.maximumf %13, %14 : vector<16x512xf32>
    %16 = arith.truncf %15 : vector<16x512xf32> to vector<16x512xbf16>
    %c0_12 = arith.constant 0 : index
    %c0_13 = arith.constant 0 : index
    %17 = vector.load %arg6[%c0_12, %c0_13] : memref<512x512xbf16, #tpu.memory_space<vmem>>, vector<512x512xbf16>
    %cst_14 = arith.constant dense<0.000000e+00> : vector<16x512xf32>
    %18 = tpu.matmul %16, %17, %cst_14 {dimension_numbers = #tpu.dot_dimension_numbers<[1], [0], [0], [1], [0, 0, 1, 1], [], []>} : vector<16x512xbf16>, vector<512x512xbf16>, vector<16x512xf32> -> vector<16x512xf32>
    %c0_15 = arith.constant 0 : index
    %c0_16 = arith.constant 0 : index
    %19 = vector.load %arg7[%c0_15, %c0_16] : memref<1x512xf32, #tpu.memory_space<vmem>>, vector<1x512xf32>
    %20 = vector.broadcast %19 : vector<1x512xf32> to vector<16x512xf32>
    %21 = arith.addf %18, %20 : vector<16x512xf32>
    %cst_17 = arith.constant 0.000000e+00 : f32
    %22 = vector.broadcast %cst_17 : f32 to vector<16x512xf32>
    %23 = arith.maximumf %21, %22 : vector<16x512xf32>
    %24 = arith.truncf %23 : vector<16x512xf32> to vector<16x512xbf16>
    %c0_18 = arith.constant 0 : index
    %c0_19 = arith.constant 0 : index
    %25 = vector.load %arg8[%c0_18, %c0_19] : memref<512x512xbf16, #tpu.memory_space<vmem>>, vector<512x512xbf16>
    %cst_20 = arith.constant dense<0.000000e+00> : vector<16x512xf32>
    %26 = tpu.matmul %24, %25, %cst_20 {dimension_numbers = #tpu.dot_dimension_numbers<[1], [0], [0], [1], [0, 0, 1, 1], [], []>} : vector<16x512xbf16>, vector<512x512xbf16>, vector<16x512xf32> -> vector<16x512xf32>
    %c0_21 = arith.constant 0 : index
    %c0_22 = arith.constant 0 : index
    %27 = vector.load %arg9[%c0_21, %c0_22] : memref<1x512xf32, #tpu.memory_space<vmem>>, vector<1x512xf32>
    %28 = vector.broadcast %27 : vector<1x512xf32> to vector<16x512xf32>
    %29 = arith.addf %26, %28 : vector<16x512xf32>
    %cst_23 = arith.constant 0.000000e+00 : f32
    %30 = vector.broadcast %cst_23 : f32 to vector<16x512xf32>
    %31 = arith.maximumf %29, %30 : vector<16x512xf32>
    %c0_24 = arith.constant 0 : index
    %c0_25 = arith.constant 0 : index
    %32 = vector.load %arg10[%c0_24, %c0_25] : memref<1x512xbf16, #tpu.memory_space<vmem>>, vector<1x512xbf16>
    %33 = arith.extf %32 : vector<1x512xbf16> to vector<1x512xf32>
    %34 = vector.broadcast %33 : vector<1x512xf32> to vector<16x512xf32>
    %35 = arith.mulf %31, %34 : vector<16x512xf32>
    %cst_26 = arith.constant dense<0.000000e+00> : vector<16xf32>
    %36 = vector.multi_reduction <add>, %35, %cst_26 [1] : vector<16x512xf32> to vector<16xf32>
    %37 = vector.shape_cast %36 : vector<16xf32> to vector<16x1xf32>
    %c0_27 = arith.constant 0 : index
    %c0_28 = arith.constant 0 : index
    %38 = vector.load %arg11[%c0_27, %c0_28] : memref<1x1xf32, #tpu.memory_space<vmem>>, vector<1x1xf32>
    %39 = vector.broadcast %38 : vector<1x1xf32> to vector<16x1xf32>
    %40 = arith.addf %37, %39 : vector<16x1xf32>
    %cst_29 = arith.constant 0.000000e+00 : f32
    %41 = vector.broadcast %cst_29 : f32 to vector<16x1xf32>
    %42 = arith.subf %41, %40 : vector<16x1xf32>
    %43 = math.exp %42 : vector<16x1xf32>
    %cst_30 = arith.constant 1.000000e+00 : f32
    %44 = vector.broadcast %cst_30 : f32 to vector<16x1xf32>
    %45 = arith.addf %44, %43 : vector<16x1xf32>
    %46 = tpu.reciprocal %45 {approx = true} : vector<16x1xf32> -> vector<16x1xf32>
    %c0_31 = arith.constant 0 : index
    %c0_32 = arith.constant 0 : index
    %47 = vector.load %arg12[%c0_31, %c0_32] : memref<16x1xf32, #tpu.memory_space<vmem>>, vector<16x1xf32>
    tpu.vector_store %arg12[%c0_31, %c0_32], %46 {strides = array<i32>} : memref<16x1xf32, #tpu.memory_space<vmem>>, vector<16x1xf32>,
    return
  }
  func.func @transform_0(%arg0: i32) -> (i32, i32) {
    %c0_i32 = arith.constant 0 : i32
    %c0_i32_0 = arith.constant 0 : i32
    return %arg0, %c0_i32 : i32, i32
  }
  func.func @transform_1(%arg0: i32) -> (i32, i32) {
    %c0_i32 = arith.constant 0 : i32
    %c0_i32_0 = arith.constant 0 : i32
    %c0_i32_1 = arith.constant 0 : i32
    return %c0_i32, %c0_i32_0 : i32, i32
  }
  func.func @transform_2(%arg0: i32) -> (i32, i32) {
    %c0_i32 = arith.constant 0 : i32
    %c0_i32_0 = arith.constant 0 : i32
    %c0_i32_1 = arith.constant 0 : i32
    return %c0_i32, %c0_i32_0 : i32, i32
  }
  func.func @transform_3(%arg0: i32) -> (i32, i32) {
    %c0_i32 = arith.constant 0 : i32
    %c0_i32_0 = arith.constant 0 : i32
    %c0_i32_1 = arith.constant 0 : i32
    return %c0_i32, %c0_i32_0 : i32, i32
  }
  func.func @transform_4(%arg0: i32) -> (i32, i32) {
    %c0_i32 = arith.constant 0 : i32
    %c0_i32_0 = arith.constant 0 : i32
    %c0_i32_1 = arith.constant 0 : i32
    return %c0_i32, %c0_i32_0 : i32, i32
  }
  func.func @transform_5(%arg0: i32) -> (i32, i32) {
    %c0_i32 = arith.constant 0 : i32
    %c0_i32_0 = arith.constant 0 : i32
    %c0_i32_1 = arith.constant 0 : i32
    return %c0_i32, %c0_i32_0 : i32, i32
  }
  func.func @transform_6(%arg0: i32) -> (i32, i32) {
    %c0_i32 = arith.constant 0 : i32
    %c0_i32_0 = arith.constant 0 : i32
    %c0_i32_1 = arith.constant 0 : i32
    return %c0_i32, %c0_i32_0 : i32, i32
  }
  func.func @transform_7(%arg0: i32) -> (i32, i32) {
    %c0_i32 = arith.constant 0 : i32
    %c0_i32_0 = arith.constant 0 : i32
    %c0_i32_1 = arith.constant 0 : i32
    return %c0_i32, %c0_i32_0 : i32, i32
  }
  func.func @transform_8(%arg0: i32) -> (i32, i32) {
    %c0_i32 = arith.constant 0 : i32
    %c0_i32_0 = arith.constant 0 : i32
    %c0_i32_1 = arith.constant 0 : i32
    return %c0_i32, %c0_i32_0 : i32, i32
  }
  func.func @transform_9(%arg0: i32) -> (i32, i32) {
    %c0_i32 = arith.constant 0 : i32
    %c0_i32_0 = arith.constant 0 : i32
    %c0_i32_1 = arith.constant 0 : i32
    return %c0_i32, %c0_i32_0 : i32, i32
  }
  func.func @transform_10(%arg0: i32) -> (i32, i32) {
    %c0_i32 = arith.constant 0 : i32
    %c0_i32_0 = arith.constant 0 : i32
    %c0_i32_1 = arith.constant 0 : i32
    return %c0_i32, %c0_i32_0 : i32, i32
  }
  func.func @transform_11(%arg0: i32) -> (i32, i32) {
    %c0_i32 = arith.constant 0 : i32
    %c0_i32_0 = arith.constant 0 : i32
    return %arg0, %c0_i32 : i32, i32
  }
}

</mosaic_0001>

<llo_original>
// kernel: discriminator_forward.1
$region0: #{discriminator_forward.1}
  #allocation0 [shape = 'u32[]', space=smem, size = 0x4, offset = 0x4, fixed_abs, tag = 'smem constant byte address 0x4 - core index']
  #allocation1 [shape = 'u32[144,128]{1,0:T(1,128)}', space=vmem, size = 0x12000, scoped, tag = 'internal scratch']
  #allocation2 [shape = 'f32[1,1]{1,0:T(1,128)S(1)}', space=vmem, size = 0x200, scoped, tag = 'scoped memory for discriminator_forward.1']
  %s0 = inlined_call_operand.vmem [shape: bf16[16,64], index: 0, kind: input, shape index: {}]
  %s1 = inlined_call_operand.hbm [shape: bf16[64,512], index: 1, kind: input, shape index: {}]
  %s2 = inlined_call_operand.vmem [shape: f32[1,512], index: 2, kind: input, shape index: {}]
  %s3 = inlined_call_operand.hbm [shape: bf16[512,512], index: 3, kind: input, shape index: {}]
  %s4 = inlined_call_operand.vmem [shape: f32[1,512], index: 4, kind: input, shape index: {}]
  %s5 = inlined_call_operand.hbm [shape: bf16[512,512], index: 5, kind: input, shape index: {}]
  %s6 = inlined_call_operand.vmem [shape: f32[1,512], index: 6, kind: input, shape index: {}]
  %s7 = inlined_call_operand.hbm [shape: bf16[512,512], index: 7, kind: input, shape index: {}]
  %s8 = inlined_call_operand.vmem [shape: f32[1,512], index: 8, kind: input, shape index: {}]
  %s9 = inlined_call_operand.vmem [shape: bf16[1,512], index: 9, kind: input, shape index: {}]
  %s10 = inlined_call_operand.<no memory space> [shape: f32[1,1], index: 10, kind: input, shape index: {}]
  %s11 = inlined_call_operand.vmem [shape: f32[16,1], index: 11, kind: output, shape index: {}]
  %s12 = sld [smem:[#allocation0]]
  $region70: #{discriminator_forward.1} parent=0
    _
  %s14 = ssub.s32 1, %s12
  %s15 = scalar_select 0, %s14, %s12
  %v16 = vstv %s10
  %17 = vst [vmem:[#allocation2] sm:$0x1] %v16
  $region1: #{discriminator_forward.1} parent=0
    #allocation3 [shape = 'u8[65536]{0}', space=vmem, size = 0x10000, scoped, tag = 'input window, operand 1, single buffered']
    #allocation4 [shape = 's32[1]{0}', space=sflag, size = 0x4, scoped, tag = 'scoped memory for discriminator_forward.1']
    #allocation5 [shape = 'u8[524288]{0}', space=vmem, size = 0x80000, scoped, tag = 'input window, operand 3, single buffered']
    #allocation6 [shape = 's32[1]{0}', space=sflag, size = 0x4, scoped, tag = 'scoped memory for discriminator_forward.1']
    #allocation7 [shape = 'u8[524288]{0}', space=vmem, size = 0x80000, scoped, tag = 'input window, operand 5, single buffered']
    #allocation8 [shape = 'u8[524288]{0}', space=vmem, size = 0x80000, scoped, tag = 'input window, operand 7, single buffered']
    #allocation9 [shape = 's32[1]{0}', space=sflag, size = 0x4, scoped, tag = 'scoped memory for discriminator_forward.1']
    %18 = vsyncpa [#allocation4], 0
    %19 = vsyncpa [#allocation6], 0
    %20 = vsyncpa [#allocation9], 0
    // Predicated region
    $region2: #{discriminator_forward.1} parent=1 // pred_check
      _
    $region3: #{discriminator_forward.1} parent=1 // pred_check_branch
      %22 = sbr.rel (0) target = $region5
    $region4: #{discriminator_forward.1} parent=1 // pred_region
      _
    $region5: #{discriminator_forward.1} parent=1 // pred_fallthru
      _
    // Predicated region
    $region6: #{discriminator_forward.1} parent=1 // pred_check
      _
    $region7: #{discriminator_forward.1} parent=1 // pred_check_branch
      %24 = sbr.rel (0) target = $region9
    $region8: #{discriminator_forward.1} parent=1 // pred_region
      %s26 = ssub.s32 2048, 2048
      %27 = vsyncadd [#allocation4], %s26
      %s28 = sshll.u32 [#allocation3], 4
      %s29 = int_to_ptr.vmem [resolvable:$true] %s28
      %34 = dma.hbm_to_vmem [thread:$0]  %s1, 2048, %s29, [#allocation4], 256, 256, 16
    $region9: #{discriminator_forward.1} parent=1 // pred_fallthru
      _
    // Predicated region
    $region10: #{discriminator_forward.1} parent=1 // pred_check
      _
    $region11: #{discriminator_forward.1} parent=1 // pred_check_branch
      %36 = sbr.rel (0) target = $region13
    $region12: #{discriminator_forward.1} parent=1 // pred_region
      _
    $region13: #{discriminator_forward.1} parent=1 // pred_fallthru
      _
    // Predicated region
    $region14: #{discriminator_forward.1} parent=1 // pred_check
      _
    $region15: #{discriminator_forward.1} parent=1 // pred_check_branch
      %38 = sbr.rel (0) target = $region17
    $region16: #{discriminator_forward.1} parent=1 // pred_region
      %s40 = ssub.s32 16384, 16384
      %41 = vsyncadd [#allocation6], %s40
      %s42 = sshll.u32 [#allocation5], 4
      %s43 = int_to_ptr.vmem [resolvable:$true] %s42
      %48 = dma.hbm_to_vmem [thread:$0]  %s3, 16384, %s43, [#allocation6], 256, 256, 16
    $region17: #{discriminator_forward.1} parent=1 // pred_fallthru
      _
    // Predicated region
    $region18: #{discriminator_forward.1} parent=1 // pred_check
      _
    $region19: #{discriminator_forward.1} parent=1 // pred_check_branch
      %50 = sbr.rel (0) target = $region21
    $region20: #{discriminator_forward.1} parent=1 // pred_region
      _
    $region21: #{discriminator_forward.1} parent=1 // pred_fallthru
      _
    // Predicated region
    $region22: #{discriminator_forward.1} parent=1 // pred_check
      _
    $region23: #{discriminator_forward.1} parent=1 // pred_check_branch
      %52 = sbr.rel (0) target = $region25
    $region24: #{discriminator_forward.1} parent=1 // pred_region
      %s54 = ssub.s32 16384, 16384
      %55 = vsyncadd [#allocation6], %s54
      %s56 = sshll.u32 [#allocation7], 4
      %s57 = int_to_ptr.vmem [resolvable:$true] %s56
      %62 = dma.hbm_to_vmem [thread:$0]  %s5, 16384, %s57, [#allocation6], 256, 256, 16
    $region25: #{discriminator_forward.1} parent=1 // pred_fallthru
      _
    // Predicated region
    $region26: #{discriminator_forward.1} parent=1 // pred_check
      _
    $region27: #{discriminator_forward.1} parent=1 // pred_check_branch
      %64 = sbr.rel (0) target = $region29
    $region28: #{discriminator_forward.1} parent=1 // pred_region
      _
    $region29: #{discriminator_forward.1} parent=1 // pred_fallthru
      _
    // Predicated region
    $region30: #{discriminator_forward.1} parent=1 // pred_check
      _
    $region31: #{discriminator_forward.1} parent=1 // pred_check_branch
      %66 = sbr.rel (0) target = $region33
    $region32: #{discriminator_forward.1} parent=1 // pred_region
      %s68 = ssub.s32 16384, 16384
      %69 = vsyncadd [#allocation9], %s68
      %s70 = sshll.u32 [#allocation8], 4
      %s71 = int_to_ptr.vmem [resolvable:$true] %s70
      %76 = dma.hbm_to_vmem [thread:$0]  %s7, 16384, %s71, [#allocation9], 256, 256, 16
    $region33: #{discriminator_forward.1} parent=1 // pred_fallthru
      _
    // Predicated region
    $region34: #{discriminator_forward.1} parent=1 // pred_check
      _
    $region35: #{discriminator_forward.1} parent=1 // pred_check_branch
      %78 = sbr.rel (0) target = $region37
    $region36: #{discriminator_forward.1} parent=1 // pred_region
      _
    $region37: #{discriminator_forward.1} parent=1 // pred_fallthru
      _
    // Predicated region
    $region38: #{discriminator_forward.1} parent=1 // pred_check
      _
    $region39: #{discriminator_forward.1} parent=1 // pred_check_branch
      %80 = sbr.rel (0) target = $region41
    $region40: #{discriminator_forward.1} parent=1 // pred_region
      _
    $region41: #{discriminator_forward.1} parent=1 // pred_fallthru
      _
    // Predicated region
    $region42: #{discriminator_forward.1} parent=1 // pred_check
      _
    $region43: #{discriminator_forward.1} parent=1 // pred_check_branch
      %82 = sbr.rel (0) target = $region45
    $region44: #{discriminator_forward.1} parent=1 // pred_region
      _
    $region45: #{discriminator_forward.1} parent=1 // pred_fallthru
      _
    // Predicated region
    $region46: #{discriminator_forward.1} parent=1 // pred_check
      _
    $region47: #{discriminator_forward.1} parent=1 // pred_check_branch
      %84 = sbr.rel (0) target = $region49
    $region48: #{discriminator_forward.1} parent=1 // pred_region
      %85 = dma.done [#allocation4], 2048
    $region49: #{discriminator_forward.1} parent=1 // pred_fallthru
      _
    // Predicated region
    $region50: #{discriminator_forward.1} parent=1 // pred_check
      _
    $region51: #{discriminator_forward.1} parent=1 // pred_check_branch
      %87 = sbr.rel (0) target = $region53
    $region52: #{discriminator_forward.1} parent=1 // pred_region
      %88 = dma.done [#allocation6], 16384
    $region53: #{discriminator_forward.1} parent=1 // pred_fallthru
      _
    // Predicated region
    $region54: #{discriminator_forward.1} parent=1 // pred_check
      _
    $region55: #{discriminator_forward.1} parent=1 // pred_check_branch
      %90 = sbr.rel (0) target = $region57
    $region56: #{discriminator_forward.1} parent=1 // pred_region
      %91 = dma.done [#allocation6], 16384
    $region57: #{discriminator_forward.1} parent=1 // pred_fallthru
      _
    // Predicated region
    $region58: #{discriminator_forward.1} parent=1 // pred_check
      _
    $region59: #{discriminator_forward.1} parent=1 // pred_check_branch
      %93 = sbr.rel (0) target = $region61
    $region60: #{discriminator_forward.1} parent=1 // pred_region
      %94 = dma.done [#allocation9], 16384
    $region61: #{discriminator_forward.1} parent=1 // pred_fallthru
      _
    %v96 = vld [vmem:[%s0] sm:$0xf]
    %v97 = vld [vmem:[%s0 + $0x4] sm:$0xf]
    %v98 = vld [vmem:[#allocation3] sm:$0xff]
    %v99 = vld [vmem:[#allocation3 + $0x8] sm:$0xff]
    %v100 = vld [vmem:[#allocation3 + $0x10] sm:$0xff]
    %v101 = vld [vmem:[#allocation3 + $0x18] sm:$0xff]
    %v102 = vld [vmem:[#allocation3 + $0x20] sm:$0xff]
    %v103 = vld [vmem:[#allocation3 + $0x28] sm:$0xff]
    %v104 = vld [vmem:[#allocation3 + $0x30] sm:$0xff]
    %v105 = vld [vmem:[#allocation3 + $0x38] sm:$0xff]
    %v106 = vld [vmem:[#allocation3 + $0x40] sm:$0xff]
    %v107 = vld [vmem:[#allocation3 + $0x48] sm:$0xff]
    %v108 = vld [vmem:[#allocation3 + $0x50] sm:$0xff]
    %v109 = vld [vmem:[#allocation3 + $0x58] sm:$0xff]
    %v110 = vld [vmem:[#allocation3 + $0x60] sm:$0xff]
    %v111 = vld [vmem:[#allocation3 + $0x68] sm:$0xff]
    %v112 = vld [vmem:[#allocation3 + $0x70] sm:$0xff]
    %v113 = vld [vmem:[#allocation3 + $0x78] sm:$0xff]
    %v114 = vld [vmem:[%s2] sm:$0xf]
    %v116 = vlaneseq
    %v117 = vshrl.u32 %v116, 7
    %v118 = vsub.s32 0, %v117
    %v119 = vrot.slane %v114, %v118
    %v120 = vlaneseq
    %v121 = vshrl.u32 %v120, 7
    %v122 = vsub.s32 1, %v121
    %v123 = vrot.slane %v114, %v122
    %v124 = vlaneseq
    %v125 = vshrl.u32 %v124, 7
    %v126 = vsub.s32 2, %v125
    %v127 = vrot.slane %v114, %v126
    %v128 = vlaneseq
    %v129 = vshrl.u32 %v128, 7
    %v130 = vsub.s32 3, %v129
    %v131 = vrot.slane %v114, %v130
    %v138 = vunpack.c.l.b16 %v96
    %v139 = vunpack.c.l.b16 %v97
    %v140 = vpack.c.b16 %v139, %v138
    %v157 = vunpack.c.l.b16 %v98
    %v158 = vunpack.c.h.b16 %v98
    %v159 = vunpack.c.l.b16 %v99
    %v160 = vunpack.c.h.b16 %v99
    %v161 = vunpack.c.l.b16 %v100
    %v162 = vunpack.c.h.b16 %v100
    %v163 = vunpack.c.l.b16 %v101
    %v164 = vunpack.c.h.b16 %v101
    %v165 = vunpack.c.l.b16 %v102
    %v166 = vunpack.c.h.b16 %v102
    %v167 = vunpack.c.l.b16 %v103
    %v168 = vunpack.c.h.b16 %v103
    %v169 = vunpack.c.l.b16 %v104
    %v170 = vunpack.c.h.b16 %v104
    %v171 = vunpack.c.l.b16 %v105
    %v172 = vunpack.c.h.b16 %v105
    %v173 = vunpack.c.l.b16 %v106
    %v174 = vunpack.c.h.b16 %v106
    %v175 = vunpack.c.l.b16 %v107
    %v176 = vunpack.c.h.b16 %v107
    %v177 = vunpack.c.l.b16 %v108
    %v178 = vunpack.c.h.b16 %v108
    %v179 = vunpack.c.l.b16 %v109
    %v180 = vunpack.c.h.b16 %v109
    %v181 = vunpack.c.l.b16 %v110
    %v182 = vunpack.c.h.b16 %v110
    %v183 = vunpack.c.l.b16 %v111
    %v184 = vunpack.c.h.b16 %v111
    %v185 = vunpack.c.l.b16 %v112
    %v186 = vunpack.c.h.b16 %v112
    %v187 = vunpack.c.l.b16 %v113
    %v188 = vunpack.c.h.b16 %v113
    %v189 = vpack.c.b16 %v161, %v157
    %v190 = vpack.c.b16 %v162, %v158
    %v191 = vpack.c.b16 %v163, %v159
    %v192 = vpack.c.b16 %v164, %v160
    %v193 = vpack.c.b16 %v169, %v165
    %v194 = vpack.c.b16 %v170, %v166
    %v195 = vpack.c.b16 %v171, %v167
    %v196 = vpack.c.b16 %v172, %v168
    %v197 = vpack.c.b16 %v177, %v173
    %v198 = vpack.c.b16 %v178, %v174
    %v199 = vpack.c.b16 %v179, %v175
    %v200 = vpack.c.b16 %v180, %v176
    %v201 = vpack.c.b16 %v185, %v181
    %v202 = vpack.c.b16 %v186, %v182
    %v203 = vpack.c.b16 %v187, %v183
    %v204 = vpack.c.b16 %v188, %v184
    %vm221 = vcmask 523264
    %v223 = vsel %vm221, %v140, 0
    %225 = vmatprep.subr.bf16.mxu0 %v190
    %226 = vmatpush1.bf16.msra.mxu0 %v189
    %227 = vmatprep.subr.bf16.mxu0 %v194
    %228 = vmatpush1.bf16.msra.mxu0 %v193
    %229 = vmatprep.subr.bf16.mxu0 %v198
    %230 = vmatpush1.bf16.msra.mxu0 %v197
    %231 = vmatprep.subr.bf16.mxu0 %v202
    %232 = vmatpush1.bf16.msra.mxu0 %v201
    %233 = vmatprep.subr.bf16.mxu0 0
    %234 = vmatpush1.bf16.msra.mxu0 0
    %235 = vmatprep.subr.bf16.mxu0 0
    %236 = vmatpush1.bf16.msra.mxu0 0
    %237 = vmatprep.subr.bf16.mxu0 0
    %238 = vmatpush1.bf16.msra.mxu0 0
    %239 = vmatprep.subr.bf16.mxu0 0
    %240 = vmatpush1.bf16.msra.mxu0 0
    %241 = vmatprep.subr.bf16.mxu0 0
    %242 = vmatpush1.bf16.msra.mxu0 0
    %243 = vmatprep.subr.bf16.mxu0 0
    %244 = vmatpush1.bf16.msra.mxu0 0
    %245 = vmatprep.subr.bf16.mxu0 0
    %246 = vmatpush1.bf16.msra.mxu0 0
    %247 = vmatprep.subr.bf16.mxu0 0
    %248 = vmatpush1.bf16.msra.mxu0 0
    %249 = vmatprep.subr.bf16.mxu0 0
    %250 = vmatpush1.bf16.msra.mxu0 0
    %251 = vmatprep.subr.bf16.mxu0 0
    %252 = vmatpush1.bf16.msra.mxu0 0
    %253 = vmatprep.subr.bf16.mxu0 0
    %254 = vmatpush1.bf16.msra.mxu0 0
    %255 = vmatprep.subr.bf16.mxu0 0
    %256 = vmatpush1.bf16.msra.mxu0 0
    %257 = vmatprep.mubr.bf16.mxu0 0
    %258 = vmatmul.mubr.bf16.gmra.mrb[0].mxu0 %v223
    %v259 = vpop.f32.mrb[0].mxu0
    %v260 = vadd.f32 %v119, %v259
    %v261 = vpop.f32.mrb[0].mxu0
    %v262 = vadd.f32 %v123, %v261
    %v263 = vpop.f32.mrb[0].mxu0
    %v264 = vadd.f32 %v119, %v263
    %v265 = vpop.f32.mrb[0].mxu0
    %v266 = vadd.f32 %v123, %v265
    %267 = vdwg.mxu0
    %268 = vmatprep.subr.bf16.mxu0 %v192
    %269 = vmatpush1.bf16.msra.mxu0 %v191
    %270 = vmatprep.subr.bf16.mxu0 %v196
    %271 = vmatpush1.bf16.msra.mxu0 %v195
    %272 = vmatprep.subr.bf16.mxu0 %v200
    %273 = vmatpush1.bf16.msra.mxu0 %v199
    %274 = vmatprep.subr.bf16.mxu0 %v204
    %275 = vmatpush1.bf16.msra.mxu0 %v203
    %276 = vmatprep.subr.bf16.mxu0 0
    %277 = vmatpush1.bf16.msra.mxu0 0
    %278 = vmatprep.subr.bf16.mxu0 0
    %279 = vmatpush1.bf16.msra.mxu0 0
    %280 = vmatprep.subr.bf16.mxu0 0
    %281 = vmatpush1.bf16.msra.mxu0 0
    %282 = vmatprep.subr.bf16.mxu0 0
    %283 = vmatpush1.bf16.msra.mxu0 0
    %284 = vmatprep.subr.bf16.mxu0 0
    %285 = vmatpush1.bf16.msra.mxu0 0
    %286 = vmatprep.subr.bf16.mxu0 0
    %287 = vmatpush1.bf16.msra.mxu0 0
    %288 = vmatprep.subr.bf16.mxu0 0
    %289 = vmatpush1.bf16.msra.mxu0 0
    %290 = vmatprep.subr.bf16.mxu0 0
    %291 = vmatpush1.bf16.msra.mxu0 0
    %292 = vmatprep.subr.bf16.mxu0 0
    %293 = vmatpush1.bf16.msra.mxu0 0
    %294 = vmatprep.subr.bf16.mxu0 0
    %295 = vmatpush1.bf16.msra.mxu0 0
    %296 = vmatprep.subr.bf16.mxu0 0
    %297 = vmatpush1.bf16.msra.mxu0 0
    %298 = vmatprep.subr.bf16.mxu0 0
    %299 = vmatpush1.bf16.msra.mxu0 0
    %300 = vmatprep.mubr.bf16.mxu0 0
    %301 = vmatmul.mubr.bf16.gmra.mrb[0].mxu0 %v223
    %v302 = vpop.f32.mrb[0].mxu0
    %v303 = vadd.f32 %v127, %v302
    %v304 = vpop.f32.mrb[0].mxu0
    %v305 = vadd.f32 %v131, %v304
    %v306 = vpop.f32.mrb[0].mxu0
    %v307 = vadd.f32 %v127, %v306
    %v308 = vpop.f32.mrb[0].mxu0
    %v309 = vadd.f32 %v131, %v308
    %310 = vdwg.mxu0
    %v311 = vmax.f32 %v260, 0.0
    %v312 = vmax.f32 %v262, 0.0
    %v313 = vmax.f32 %v303, 0.0
    %v314 = vmax.f32 %v305, 0.0
    %v315 = vmax.f32 %v264, 0.0
    %v316 = vmax.f32 %v266, 0.0
    %v317 = vmax.f32 %v307, 0.0
    %v318 = vmax.f32 %v309, 0.0
    %v319 = vpack.c.bf16 %v315, %v311
    %v320 = vpack.c.bf16 %v316, %v312
    %v321 = vpack.c.bf16 %v317, %v313
    %v322 = vpack.c.bf16 %v318, %v314
    %v323 = vld [vmem:[#allocation5] sm:$0xff]
    %v324 = vld [vmem:[#allocation5 + $0x8] sm:$0xff]
    %v325 = vld [vmem:[#allocation5 + $0x10] sm:$0xff]
    %v326 = vld [vmem:[#allocation5 + $0x18] sm:$0xff]
    %v327 = vld [vmem:[#allocation5 + $0x20] sm:$0xff]
    %v328 = vld [vmem:[#allocation5 + $0x28] sm:$0xff]
    %v329 = vld [vmem:[#allocation5 + $0x30] sm:$0xff]
    %v330 = vld [vmem:[#allocation5 + $0x38] sm:$0xff]
    %v331 = vld [vmem:[#allocation5 + $0x40] sm:$0xff]
    %v332 = vld [vmem:[#allocation5 + $0x48] sm:$0xff]
    %v333 = vld [vmem:[#allocation5 + $0x50] sm:$0xff]
    %v334 = vld [vmem:[#allocation5 + $0x58] sm:$0xff]
    %v335 = vld [vmem:[#allocation5 + $0x60] sm:$0xff]
    %v336 = vld [vmem:[#allocation5 + $0x68] sm:$0xff]
    %v337 = vld [vmem:[#allocation5 + $0x70] sm:$0xff]
    %v338 = vld [vmem:[#allocation5 + $0x78] sm:$0xff]
    %v339 = vld [vmem:[#allocation5 + $0x80] sm:$0xff]
    %v340 = vld [vmem:[#allocation5 + $0x88] sm:$0xff]
    %v341 = vld [vmem:[#allocation5 + $0x90] sm:$0xff]
    %v342 = vld [vmem:[#allocation5 + $0x98] sm:$0xff]
    %v343 = vld [vmem:[#allocation5 + $0xa0] sm:$0xff]
    %v344 = vld [vmem:[#allocation5 + $0xa8] sm:$0xff]
    %v345 = vld [vmem:[#allocation5 + $0xb0] sm:$0xff]
    %v346 = vld [vmem:[#allocation5 + $0xb8] sm:$0xff]
    %v347 = vld [vmem:[#allocation5 + $0xc0] sm:$0xff]
    %v348 = vld [vmem:[#allocation5 + $0xc8] sm:$0xff]
    %v349 = vld [vmem:[#allocation5 + $0xd0] sm:$0xff]
    %v350 = vld [vmem:[#allocation5 + $0xd8] sm:$0xff]
    %v351 = vld [vmem:[#allocation5 + $0xe0] sm:$0xff]
    %v352 = vld [vmem:[#allocation5 + $0xe8] sm:$0xff]
    %v353 = vld [vmem:[#allocation5 + $0xf0] sm:$0xff]
    %v354 = vld [vmem:[#allocation5 + $0xf8] sm:$0xff]
    %v355 = vld [vmem:[#allocation5 + $0x100] sm:$0xff]
    %v356 = vld [vmem:[#allocation5 + $0x108] sm:$0xff]
    %v357 = vld [vmem:[#allocation5 + $0x110] sm:$0xff]
    %v358 = vld [vmem:[#allocation5 + $0x118] sm:$0xff]
    %v359 = vld [vmem:[#allocation5 + $0x120] sm:$0xff]
    %v360 = vld [vmem:[#allocation5 + $0x128] sm:$0xff]
    %v361 = vld [vmem:[#allocation5 + $0x130] sm:$0xff]
    %v362 = vld [vmem:[#allocation5 + $0x138] sm:$0xff]
    %v363 = vld [vmem:[#allocation5 + $0x140] sm:$0xff]
    %v364 = vld [vmem:[#allocation5 + $0x148] sm:$0xff]
    %v365 = vld [vmem:[#allocation5 + $0x150] sm:$0xff]
    %v366 = vld [vmem:[#allocation5 + $0x158] sm:$0xff]
    %v367 = vld [vmem:[#allocation5 + $0x160] sm:$0xff]
    %v368 = vld [vmem:[#allocation5 + $0x168] sm:$0xff]
    %v369 = vld [vmem:[#allocation5 + $0x170] sm:$0xff]
    %v370 = vld [vmem:[#allocation5 + $0x178] sm:$0xff]
    %v371 = vld [vmem:[#allocation5 + $0x180] sm:$0xff]
    %v372 = vld [vmem:[#allocation5 + $0x188] sm:$0xff]
    %v373 = vld [vmem:[#allocation5 + $0x190] sm:$0xff]
    %v374 = vld [vmem:[#allocation5 + $0x198] sm:$0xff]
    %v375 = vld [vmem:[#allocation5 + $0x1a0] sm:$0xff]
    %v376 = vld [vmem:[#allocation5 + $0x1a8] sm:$0xff]
    %v377 = vld [vmem:[#allocation5 + $0x1b0] sm:$0xff]
    %v378 = vld [vmem:[#allocation5 + $0x1b8] sm:$0xff]
    %v379 = vld [vmem:[#allocation5 + $0x1c0] sm:$0xff]
    %v380 = vld [vmem:[#allocation5 + $0x1c8] sm:$0xff]
    %v381 = vld [vmem:[#allocation5 + $0x1d0] sm:$0xff]
    %v382 = vld [vmem:[#allocation5 + $0x1d8] sm:$0xff]
    %v383 = vld [vmem:[#allocation5 + $0x1e0] sm:$0xff]
    %v384 = vld [vmem:[#allocation5 + $0x1e8] sm:$0xff]
    %v385 = vld [vmem:[#allocation5 + $0x1f0] sm:$0xff]
    %v386 = vld [vmem:[#allocation5 + $0x1f8] sm:$0xff]
    %v387 = vld [vmem:[#allocation5 + $0x200] sm:$0xff]
    %v388 = vld [vmem:[#allocation5 + $0x208] sm:$0xff]
    %v389 = vld [vmem:[#allocation5 + $0x210] sm:$0xff]
    %v390 = vld [vmem:[#allocation5 + $0x218] sm:$0xff]
    %v391 = vld [vmem:[#allocation5 + $0x220] sm:$0xff]
    %v392 = vld [vmem:[#allocation5 + $0x228] sm:$0xff]
    %v393 = vld [vmem:[#allocation5 + $0x230] sm:$0xff]
    %v394 = vld [vmem:[#allocation5 + $0x238] sm:$0xff]
    %v395 = vld [vmem:[#allocation5 + $0x240] sm:$0xff]
    %v396 = vld [vmem:[#allocation5 + $0x248] sm:$0xff]
    %v397 = vld [vmem:[#allocation5 + $0x250] sm:$0xff]
    %v398 = vld [vmem:[#allocation5 + $0x258] sm:$0xff]
    %v399 = vld [vmem:[#allocation5 + $0x260] sm:$0xff]
    %v400 = vld [vmem:[#allocation5 + $0x268] sm:$0xff]
    %v401 = vld [vmem:[#allocation5 + $0x270] sm:$0xff]
    %v402 = vld [vmem:[#allocation5 + $0x278] sm:$0xff]
    %v403 = vld [vmem:[#allocation5 + $0x280] sm:$0xff]
    %v404 = vld [vmem:[#allocation5 + $0x288] sm:$0xff]
    %v405 = vld [vmem:[#allocation5 + $0x290] sm:$0xff]
    %v406 = vld [vmem:[#allocation5 + $0x298] sm:$0xff]
    %v407 = vld [vmem:[#allocation5 + $0x2a0] sm:$0xff]
    %v408 = vld [vmem:[#allocation5 + $0x2a8] sm:$0xff]
    %v409 = vld [vmem:[#allocation5 + $0x2b0] sm:$0xff]
    %v410 = vld [vmem:[#allocation5 + $0x2b8] sm:$0xff]
    %v411 = vld [vmem:[#allocation5 + $0x2c0] sm:$0xff]
    %v412 = vld [vmem:[#allocation5 + $0x2c8] sm:$0xff]
    %v413 = vld [vmem:[#allocation5 + $0x2d0] sm:$0xff]
    %v414 = vld [vmem:[#allocation5 + $0x2d8] sm:$0xff]
    %v415 = vld [vmem:[#allocation5 + $0x2e0] sm:$0xff]
    %v416 = vld [vmem:[#allocation5 + $0x2e8] sm:$0xff]
    %v417 = vld [vmem:[#allocation5 + $0x2f0] sm:$0xff]
    %v418 = vld [vmem:[#allocation5 + $0x2f8] sm:$0xff]
    %v419 = vld [vmem:[#allocation5 + $0x300] sm:$0xff]
    %v420 = vld [vmem:[#allocation5 + $0x308] sm:$0xff]
    %v421 = vld [vmem:[#allocation5 + $0x310] sm:$0xff]
    %v422 = vld [vmem:[#allocation5 + $0x318] sm:$0xff]
    %v423 = vld [vmem:[#allocation5 + $0x320] sm:$0xff]
    %v424 = vld [vmem:[#allocation5 + $0x328] sm:$0xff]
    %v425 = vld [vmem:[#allocation5 + $0x330] sm:$0xff]
    %v426 = vld [vmem:[#allocation5 + $0x338] sm:$0xff]
    %v427 = vld [vmem:[#allocation5 + $0x340] sm:$0xff]
    %v428 = vld [vmem:[#allocation5 + $0x348] sm:$0xff]
    %v429 = vld [vmem:[#allocation5 + $0x350] sm:$0xff]
    %v430 = vld [vmem:[#allocation5 + $0x358] sm:$0xff]
    %v431 = vld [vmem:[#allocation5 + $0x360] sm:$0xff]
    %v432 = vld [vmem:[#allocation5 + $0x368] sm:$0xff]
    %v433 = vld [vmem:[#allocation5 + $0x370] sm:$0xff]
    %v434 = vld [vmem:[#allocation5 + $0x378] sm:$0xff]
    %v435 = vld [vmem:[#allocation5 + $0x380] sm:$0xff]
    %v436 = vld [vmem:[#allocation5 + $0x388] sm:$0xff]
    %v437 = vld [vmem:[#allocation5 + $0x390] sm:$0xff]
    %v438 = vld [vmem:[#allocation5 + $0x398] sm:$0xff]
    %v439 = vld [vmem:[#allocation5 + $0x3a0] sm:$0xff]
    %v440 = vld [vmem:[#allocation5 + $0x3a8] sm:$0xff]
    %v441 = vld [vmem:[#allocation5 + $0x3b0] sm:$0xff]
    %v442 = vld [vmem:[#allocation5 + $0x3b8] sm:$0xff]
    %v443 = vld [vmem:[#allocation5 + $0x3c0] sm:$0xff]
    %v444 = vld [vmem:[#allocation5 + $0x3c8] sm:$0xff]
    %v445 = vld [vmem:[#allocation5 + $0x3d0] sm:$0xff]
    %v446 = vld [vmem:[#allocation5 + $0x3d8] sm:$0xff]
    %v447 = vld [vmem:[#allocation5 + $0x3e0] sm:$0xff]
    %v448 = vld [vmem:[#allocation5 + $0x3e8] sm:$0xff]
    %v449 = vld [vmem:[#allocation5 + $0x3f0] sm:$0xff]
    %v450 = vld [vmem:[#allocation5 + $0x3f8] sm:$0xff]
    %v451 = vld [vmem:[%s4] sm:$0xf]
    %v453 = vlaneseq
    %v454 = vshrl.u32 %v453, 7
    %v455 = vsub.s32 0, %v454
    %v456 = vrot.slane %v451, %v455
    %v457 = vlaneseq
    %v458 = vshrl.u32 %v457, 7
    %v459 = vsub.s32 1, %v458
    %v460 = vrot.slane %v451, %v459
    %v461 = vlaneseq
    %v462 = vshrl.u32 %v461, 7
    %v463 = vsub.s32 2, %v462
    %v464 = vrot.slane %v451, %v463
    %v465 = vlaneseq
    %v466 = vshrl.u32 %v465, 7
    %v467 = vsub.s32 3, %v466
    %v468 = vrot.slane %v451, %v467
    %v601 = vunpack.c.l.b16 %v323
    %v602 = vunpack.c.h.b16 %v323
    %v603 = vunpack.c.l.b16 %v324
    %v604 = vunpack.c.h.b16 %v324
    %v605 = vunpack.c.l.b16 %v325
    %v606 = vunpack.c.h.b16 %v325
    %v607 = vunpack.c.l.b16 %v326
    %v608 = vunpack.c.h.b16 %v326
    %v609 = vunpack.c.l.b16 %v327
    %v610 = vunpack.c.h.b16 %v327
    %v611 = vunpack.c.l.b16 %v328
    %v612 = vunpack.c.h.b16 %v328
    %v613 = vunpack.c.l.b16 %v329
    %v614 = vunpack.c.h.b16 %v329
    %v615 = vunpack.c.l.b16 %v330
    %v616 = vunpack.c.h.b16 %v330
    %v617 = vunpack.c.l.b16 %v331
    %v618 = vunpack.c.h.b16 %v331
    %v619 = vunpack.c.l.b16 %v332
    %v620 = vunpack.c.h.b16 %v332
    %v621 = vunpack.c.l.b16 %v333
    %v622 = vunpack.c.h.b16 %v333
    %v623 = vunpack.c.l.b16 %v334
    %v624 = vunpack.c.h.b16 %v334
    %v625 = vunpack.c.l.b16 %v335
    %v626 = vunpack.c.h.b16 %v335
    %v627 = vunpack.c.l.b16 %v336
    %v628 = vunpack.c.h.b16 %v336
    %v629 = vunpack.c.l.b16 %v337
    %v630 = vunpack.c.h.b16 %v337
    %v631 = vunpack.c.l.b16 %v338
    %v632 = vunpack.c.h.b16 %v338
    %v633 = vunpack.c.l.b16 %v339
    %v634 = vunpack.c.h.b16 %v339
    %v635 = vunpack.c.l.b16 %v340
    %v636 = vunpack.c.h.b16 %v340
    %v637 = vunpack.c.l.b16 %v341
    %v638 = vunpack.c.h.b16 %v341
    %v639 = vunpack.c.l.b16 %v342
    %v640 = vunpack.c.h.b16 %v342
    %v641 = vunpack.c.l.b16 %v343
    %v642 = vunpack.c.h.b16 %v343
    %v643 = vunpack.c.l.b16 %v344
    %v644 = vunpack.c.h.b16 %v344
    %v645 = vunpack.c.l.b16 %v345
    %v646 = vunpack.c.h.b16 %v345
    %v647 = vunpack.c.l.b16 %v346
    %v648 = vunpack.c.h.b16 %v346
    %v649 = vunpack.c.l.b16 %v347
    %v650 = vunpack.c.h.b16 %v347
    %v651 = vunpack.c.l.b16 %v348
    %v652 = vunpack.c.h.b16 %v348
    %v653 = vunpack.c.l.b16 %v349
    %v654 = vunpack.c.h.b16 %v349
    %v655 = vunpack.c.l.b16 %v350
    %v656 = vunpack.c.h.b16 %v350
    %v657 = vunpack.c.l.b16 %v351
    %v658 = vunpack.c.h.b16 %v351
    %v659 = vunpack.c.l.b16 %v352
    %v660 = vunpack.c.h.b16 %v352
    %v661 = vunpack.c.l.b16 %v353
    %v662 = vunpack.c.h.b16 %v353
    %v663 = vunpack.c.l.b16 %v354
    %v664 = vunpack.c.h.b16 %v354
    %v665 = vunpack.c.l.b16 %v355
    %v666 = vunpack.c.h.b16 %v355
    %v667 = vunpack.c.l.b16 %v356
    %v668 = vunpack.c.h.b16 %v356
    %v669 = vunpack.c.l.b16 %v357
    %v670 = vunpack.c.h.b16 %v357
    %v671 = vunpack.c.l.b16 %v358
    %v672 = vunpack.c.h.b16 %v358
    %v673 = vunpack.c.l.b16 %v359
    %v674 = vunpack.c.h.b16 %v359
    %v675 = vunpack.c.l.b16 %v360
    %v676 = vunpack.c.h.b16 %v360
    %v677 = vunpack.c.l.b16 %v361
    %v678 = vunpack.c.h.b16 %v361
    %v679 = vunpack.c.l.b16 %v362
    %v680 = vunpack.c.h.b16 %v362
    %v681 = vunpack.c.l.b16 %v363
    %v682 = vunpack.c.h.b16 %v363
    %v683 = vunpack.c.l.b16 %v364
    %v684 = vunpack.c.h.b16 %v364
    %v685 = vunpack.c.l.b16 %v365
    %v686 = vunpack.c.h.b16 %v365
    %v687 = vunpack.c.l.b16 %v366
    %v688 = vunpack.c.h.b16 %v366
    %v689 = vunpack.c.l.b16 %v367
    %v690 = vunpack.c.h.b16 %v367
    %v691 = vunpack.c.l.b16 %v368
    %v692 = vunpack.c.h.b16 %v368
    %v693 = vunpack.c.l.b16 %v369
    %v694 = vunpack.c.h.b16 %v369
    %v695 = vunpack.c.l.b16 %v370
    %v696 = vunpack.c.h.b16 %v370
    %v697 = vunpack.c.l.b16 %v371
    %v698 = vunpack.c.h.b16 %v371
    %v699 = vunpack.c.l.b16 %v372
    %v700 = vunpack.c.h.b16 %v372
    %v701 = vunpack.c.l.b16 %v373
    %v702 = vunpack.c.h.b16 %v373
    %v703 = vunpack.c.l.b16 %v374
    %v704 = vunpack.c.h.b16 %v374
    %v705 = vunpack.c.l.b16 %v375
    %v706 = vunpack.c.h.b16 %v375
    %v707 = vunpack.c.l.b16 %v376
    %v708 = vunpack.c.h.b16 %v376
    %v709 = vunpack.c.l.b16 %v377
    %v710 = vunpack.c.h.b16 %v377
    %v711 = vunpack.c.l.b16 %v378
    %v712 = vunpack.c.h.b16 %v378
    %v713 = vunpack.c.l.b16 %v379
    %v714 = vunpack.c.h.b16 %v379
    %v715 = vunpack.c.l.b16 %v380
    %v716 = vunpack.c.h.b16 %v380
    %v717 = vunpack.c.l.b16 %v381
    %v718 = vunpack.c.h.b16 %v381
    %v719 = vunpack.c.l.b16 %v382
    %v720 = vunpack.c.h.b16 %v382
    %v721 = vunpack.c.l.b16 %v383
    %v722 = vunpack.c.h.b16 %v383
    %v723 = vunpack.c.l.b16 %v384
    %v724 = vunpack.c.h.b16 %v384
    %v725 = vunpack.c.l.b16 %v385
    %v726 = vunpack.c.h.b16 %v385
    %v727 = vunpack.c.l.b16 %v386
    %v728 = vunpack.c.h.b16 %v386
    %v729 = vunpack.c.l.b16 %v387
    %v730 = vunpack.c.h.b16 %v387
    %v731 = vunpack.c.l.b16 %v388
    %v732 = vunpack.c.h.b16 %v388
    %v733 = vunpack.c.l.b16 %v389
    %v734 = vunpack.c.h.b16 %v389
    %v735 = vunpack.c.l.b16 %v390
    %v736 = vunpack.c.h.b16 %v390
    %v737 = vunpack.c.l.b16 %v391
    %v738 = vunpack.c.h.b16 %v391
    %v739 = vunpack.c.l.b16 %v392
    %v740 = vunpack.c.h.b16 %v392
    %v741 = vunpack.c.l.b16 %v393
    %v742 = vunpack.c.h.b16 %v393
    %v743 = vunpack.c.l.b16 %v394
    %v744 = vunpack.c.h.b16 %v394
    %v745 = vunpack.c.l.b16 %v395
    %v746 = vunpack.c.h.b16 %v395
    %v747 = vunpack.c.l.b16 %v396
    %v748 = vunpack.c.h.b16 %v396
    %v749 = vunpack.c.l.b16 %v397
    %v750 = vunpack.c.h.b16 %v397
    %v751 = vunpack.c.l.b16 %v398
    %v752 = vunpack.c.h.b16 %v398
    %v753 = vunpack.c.l.b16 %v399
    %v754 = vunpack.c.h.b16 %v399
    %v755 = vunpack.c.l.b16 %v400
    %v756 = vunpack.c.h.b16 %v400
    %v757 = vunpack.c.l.b16 %v401
    %v758 = vunpack.c.h.b16 %v401
    %v759 = vunpack.c.l.b16 %v402
    %v760 = vunpack.c.h.b16 %v402
    %v761 = vunpack.c.l.b16 %v403
    %v762 = vunpack.c.h.b16 %v403
    %v763 = vunpack.c.l.b16 %v404
    %v764 = vunpack.c.h.b16 %v404
    %v765 = vunpack.c.l.b16 %v405
    %v766 = vunpack.c.h.b16 %v405
    %v767 = vunpack.c.l.b16 %v406
    %v768 = vunpack.c.h.b16 %v406
    %v769 = vunpack.c.l.b16 %v407
    %v770 = vunpack.c.h.b16 %v407
    %v771 = vunpack.c.l.b16 %v408
    %v772 = vunpack.c.h.b16 %v408
    %v773 = vunpack.c.l.b16 %v409
    %v774 = vunpack.c.h.b16 %v409
    %v775 = vunpack.c.l.b16 %v410
    %v776 = vunpack.c.h.b16 %v410
    %v777 = vunpack.c.l.b16 %v411
    %v778 = vunpack.c.h.b16 %v411
    %v779 = vunpack.c.l.b16 %v412
    %v780 = vunpack.c.h.b16 %v412
    %v781 = vunpack.c.l.b16 %v413
    %v782 = vunpack.c.h.b16 %v413
    %v783 = vunpack.c.l.b16 %v414
    %v784 = vunpack.c.h.b16 %v414
    %v785 = vunpack.c.l.b16 %v415
    %v786 = vunpack.c.h.b16 %v415
    %v787 = vunpack.c.l.b16 %v416
    %v788 = vunpack.c.h.b16 %v416
    %v789 = vunpack.c.l.b16 %v417
    %v790 = vunpack.c.h.b16 %v417
    %v791 = vunpack.c.l.b16 %v418
    %v792 = vunpack.c.h.b16 %v418
    %v793 = vunpack.c.l.b16 %v419
    %v794 = vunpack.c.h.b16 %v419
    %v795 = vunpack.c.l.b16 %v420
    %v796 = vunpack.c.h.b16 %v420
    %v797 = vunpack.c.l.b16 %v421
    %v798 = vunpack.c.h.b16 %v421
    %v799 = vunpack.c.l.b16 %v422
    %v800 = vunpack.c.h.b16 %v422
    %v801 = vunpack.c.l.b16 %v423
    %v802 = vunpack.c.h.b16 %v423
    %v803 = vunpack.c.l.b16 %v424
    %v804 = vunpack.c.h.b16 %v424
    %v805 = vunpack.c.l.b16 %v425
    %v806 = vunpack.c.h.b16 %v425
    %v807 = vunpack.c.l.b16 %v426
    %v808 = vunpack.c.h.b16 %v426
    %v809 = vunpack.c.l.b16 %v427
    %v810 = vunpack.c.h.b16 %v427
    %v811 = vunpack.c.l.b16 %v428
    %v812 = vunpack.c.h.b16 %v428
    %v813 = vunpack.c.l.b16 %v429
    %v814 = vunpack.c.h.b16 %v429
    %v815 = vunpack.c.l.b16 %v430
    %v816 = vunpack.c.h.b16 %v430
    %v817 = vunpack.c.l.b16 %v431
    %v818 = vunpack.c.h.b16 %v431
    %v819 = vunpack.c.l.b16 %v432
    %v820 = vunpack.c.h.b16 %v432
    %v821 = vunpack.c.l.b16 %v433
    %v822 = vunpack.c.h.b16 %v433
    %v823 = vunpack.c.l.b16 %v434
    %v824 = vunpack.c.h.b16 %v434
    %v825 = vunpack.c.l.b16 %v435
    %v826 = vunpack.c.h.b16 %v435
    %v827 = vunpack.c.l.b16 %v436
    %v828 = vunpack.c.h.b16 %v436
    %v829 = vunpack.c.l.b16 %v437
    %v830 = vunpack.c.h.b16 %v437
    %v831 = vunpack.c.l.b16 %v438
    %v832 = vunpack.c.h.b16 %v438
    %v833 = vunpack.c.l.b16 %v439
    %v834 = vunpack.c.h.b16 %v439
    %v835 = vunpack.c.l.b16 %v440
    %v836 = vunpack.c.h.b16 %v440
    %v837 = vunpack.c.l.b16 %v441
    %v838 = vunpack.c.h.b16 %v441
    %v839 = vunpack.c.l.b16 %v442
    %v840 = vunpack.c.h.b16 %v442
    %v841 = vunpack.c.l.b16 %v443
    %v842 = vunpack.c.h.b16 %v443
    %v843 = vunpack.c.l.b16 %v444
    %v844 = vunpack.c.h.b16 %v444
    %v845 = vunpack.c.l.b16 %v445
    %v846 = vunpack.c.h.b16 %v445
    %v847 = vunpack.c.l.b16 %v446
    %v848 = vunpack.c.h.b16 %v446
    %v849 = vunpack.c.l.b16 %v447
    %v850 = vunpack.c.h.b16 %v447
    %v851 = vunpack.c.l.b16 %v448
    %v852 = vunpack.c.h.b16 %v448
    %v853 = vunpack.c.l.b16 %v449
    %v854 = vunpack.c.h.b16 %v449
    %v855 = vunpack.c.l.b16 %v450
    %v856 = vunpack.c.h.b16 %v450
    %v857 = vpack.c.b16 %v605, %v601
    %v858 = vpack.c.b16 %v606, %v602
    %v859 = vpack.c.b16 %v607, %v603
    %v860 = vpack.c.b16 %v608, %v604
    %v861 = vpack.c.b16 %v613, %v609
    %v862 = vpack.c.b16 %v614, %v610
    %v863 = vpack.c.b16 %v615, %v611
    %v864 = vpack.c.b16 %v616, %v612
    %v865 = vpack.c.b16 %v621, %v617
    %v866 = vpack.c.b16 %v622, %v618
    %v867 = vpack.c.b16 %v623, %v619
    %v868 = vpack.c.b16 %v624, %v620
    %v869 = vpack.c.b16 %v629, %v625
    %v870 = vpack.c.b16 %v630, %v626
    %v871 = vpack.c.b16 %v631, %v627
    %v872 = vpack.c.b16 %v632, %v628
    %v873 = vpack.c.b16 %v637, %v633
    %v874 = vpack.c.b16 %v638, %v634
    %v875 = vpack.c.b16 %v639, %v635
    %v876 = vpack.c.b16 %v640, %v636
    %v877 = vpack.c.b16 %v645, %v641
    %v878 = vpack.c.b16 %v646, %v642
    %v879 = vpack.c.b16 %v647, %v643
    %v880 = vpack.c.b16 %v648, %v644
    %v881 = vpack.c.b16 %v653, %v649
    %v882 = vpack.c.b16 %v654, %v650
    %v883 = vpack.c.b16 %v655, %v651
    %v884 = vpack.c.b16 %v656, %v652
    %v885 = vpack.c.b16 %v661, %v657
    %v886 = vpack.c.b16 %v662, %v658
    %v887 = vpack.c.b16 %v663, %v659
    %v888 = vpack.c.b16 %v664, %v660
    %v889 = vpack.c.b16 %v669, %v665
    %v890 = vpack.c.b16 %v670, %v666
    %v891 = vpack.c.b16 %v671, %v667
    %v892 = vpack.c.b16 %v672, %v668
    %v893 = vpack.c.b16 %v677, %v673
    %v894 = vpack.c.b16 %v678, %v674
    %v895 = vpack.c.b16 %v679, %v675
    %v896 = vpack.c.b16 %v680, %v676
    %v897 = vpack.c.b16 %v685, %v681
    %v898 = vpack.c.b16 %v686, %v682
    %v899 = vpack.c.b16 %v687, %v683
    %v900 = vpack.c.b16 %v688, %v684
    %v901 = vpack.c.b16 %v693, %v689
    %v902 = vpack.c.b16 %v694, %v690
    %v903 = vpack.c.b16 %v695, %v691
    %v904 = vpack.c.b16 %v696, %v692
    %v905 = vpack.c.b16 %v701, %v697
    %v906 = vpack.c.b16 %v702, %v698
    %v907 = vpack.c.b16 %v703, %v699
    %v908 = vpack.c.b16 %v704, %v700
    %v909 = vpack.c.b16 %v709, %v705
    %v910 = vpack.c.b16 %v710, %v706
    %v911 = vpack.c.b16 %v711, %v707
    %v912 = vpack.c.b16 %v712, %v708
    %v913 = vpack.c.b16 %v717, %v713
    %v914 = vpack.c.b16 %v718, %v714
    %v915 = vpack.c.b16 %v719, %v715
    %v916 = vpack.c.b16 %v720, %v716
    %v917 = vpack.c.b16 %v725, %v721
    %v918 = vpack.c.b16 %v726, %v722
    %v919 = vpack.c.b16 %v727, %v723
    %v920 = vpack.c.b16 %v728, %v724
    %v921 = vpack.c.b16 %v733, %v729
    %v922 = vpack.c.b16 %v734, %v730
    %v923 = vpack.c.b16 %v735, %v731
    %v924 = vpack.c.b16 %v736, %v732
    %v925 = vpack.c.b16 %v741, %v737
    %v926 = vpack.c.b16 %v742, %v738
    %v927 = vpack.c.b16 %v743, %v739
    %v928 = vpack.c.b16 %v744, %v740
    %v929 = vpack.c.b16 %v749, %v745
    %v930 = vpack.c.b16 %v750, %v746
    %v931 = vpack.c.b16 %v751, %v747
    %v932 = vpack.c.b16 %v752, %v748
    %v933 = vpack.c.b16 %v757, %v753
    %v934 = vpack.c.b16 %v758, %v754
    %v935 = vpack.c.b16 %v759, %v755
    %v936 = vpack.c.b16 %v760, %v756
    %v937 = vpack.c.b16 %v765, %v761
    %v938 = vpack.c.b16 %v766, %v762
    %v939 = vpack.c.b16 %v767, %v763
    %v940 = vpack.c.b16 %v768, %v764
    %v941 = vpack.c.b16 %v773, %v769
    %v942 = vpack.c.b16 %v774, %v770
    %v943 = vpack.c.b16 %v775, %v771
    %v944 = vpack.c.b16 %v776, %v772
    %v945 = vpack.c.b16 %v781, %v777
    %v946 = vpack.c.b16 %v782, %v778
    %v947 = vpack.c.b16 %v783, %v779
    %v948 = vpack.c.b16 %v784, %v780
    %v949 = vpack.c.b16 %v789, %v785
    %v950 = vpack.c.b16 %v790, %v786
    %v951 = vpack.c.b16 %v791, %v787
    %v952 = vpack.c.b16 %v792, %v788
    %v953 = vpack.c.b16 %v797, %v793
    %v954 = vpack.c.b16 %v798, %v794
    %v955 = vpack.c.b16 %v799, %v795
    %v956 = vpack.c.b16 %v800, %v796
    %v957 = vpack.c.b16 %v805, %v801
    %v958 = vpack.c.b16 %v806, %v802
    %v959 = vpack.c.b16 %v807, %v803
    %v960 = vpack.c.b16 %v808, %v804
    %v961 = vpack.c.b16 %v813, %v809
    %v962 = vpack.c.b16 %v814, %v810
    %v963 = vpack.c.b16 %v815, %v811
    %v964 = vpack.c.b16 %v816, %v812
    %v965 = vpack.c.b16 %v821, %v817
    %v966 = vpack.c.b16 %v822, %v818
    %v967 = vpack.c.b16 %v823, %v819
    %v968 = vpack.c.b16 %v824, %v820
    %v969 = vpack.c.b16 %v829, %v825
    %v970 = vpack.c.b16 %v830, %v826
    %v971 = vpack.c.b16 %v831, %v827
    %v972 = vpack.c.b16 %v832, %v828
    %v973 = vpack.c.b16 %v837, %v833
    %v974 = vpack.c.b16 %v838, %v834
    %v975 = vpack.c.b16 %v839, %v835
    %v976 = vpack.c.b16 %v840, %v836
    %v977 = vpack.c.b16 %v845, %v841
    %v978 = vpack.c.b16 %v846, %v842
    %v979 = vpack.c.b16 %v847, %v843
    %v980 = vpack.c.b16 %v848, %v844
    %v981 = vpack.c.b16 %v853, %v849
    %v982 = vpack.c.b16 %v854, %v850
    %v983 = vpack.c.b16 %v855, %v851
    %v984 = vpack.c.b16 %v856, %v852
    %1113 = vmatprep.subr.bf16.mxu0 %v858
    %1114 = vmatpush1.bf16.msra.mxu0 %v857
    %1115 = vmatprep.subr.bf16.mxu0 %v862
    %1116 = vmatpush1.bf16.msra.mxu0 %v861
    %1117 = vmatprep.subr.bf16.mxu0 %v866
    %1118 = vmatpush1.bf16.msra.mxu0 %v865
    %1119 = vmatprep.subr.bf16.mxu0 %v870
    %1120 = vmatpush1.bf16.msra.mxu0 %v869
    %1121 = vmatprep.subr.bf16.mxu0 %v874
    %1122 = vmatpush1.bf16.msra.mxu0 %v873
    %1123 = vmatprep.subr.bf16.mxu0 %v878
    %1124 = vmatpush1.bf16.msra.mxu0 %v877
    %1125 = vmatprep.subr.bf16.mxu0 %v882
    %1126 = vmatpush1.bf16.msra.mxu0 %v881
    %1127 = vmatprep.subr.bf16.mxu0 %v886
    %1128 = vmatpush1.bf16.msra.mxu0 %v885
    %1129 = vmatprep.subr.bf16.mxu0 %v890
    %1130 = vmatpush1.bf16.msra.mxu0 %v889
    %1131 = vmatprep.subr.bf16.mxu0 %v894
    %1132 = vmatpush1.bf16.msra.mxu0 %v893
    %1133 = vmatprep.subr.bf16.mxu0 %v898
    %1134 = vmatpush1.bf16.msra.mxu0 %v897
    %1135 = vmatprep.subr.bf16.mxu0 %v902
    %1136 = vmatpush1.bf16.msra.mxu0 %v901
    %1137 = vmatprep.subr.bf16.mxu0 %v906
    %1138 = vmatpush1.bf16.msra.mxu0 %v905
    %1139 = vmatprep.subr.bf16.mxu0 %v910
    %1140 = vmatpush1.bf16.msra.mxu0 %v909
    %1141 = vmatprep.subr.bf16.mxu0 %v914
    %1142 = vmatpush1.bf16.msra.mxu0 %v913
    %1143 = vmatprep.subr.bf16.mxu0 %v918
    %1144 = vmatpush1.bf16.msra.mxu0 %v917
    %1145 = vmatprep.mubr.bf16.mxu0 %v320
    %1146 = vmatmul.mubr.bf16.gmra.mrb[0].mxu0 %v319
    %v1147 = vpop.f32.mrb[0].mxu0
    %v1148 = vadd.f32 %v456, %v1147
    %v1149 = vpop.f32.mrb[0].mxu0
    %v1150 = vadd.f32 %v460, %v1149
    %v1151 = vpop.f32.mrb[0].mxu0
    %v1152 = vadd.f32 %v456, %v1151
    %v1153 = vpop.f32.mrb[0].mxu0
    %v1154 = vadd.f32 %v460, %v1153
    %1155 = vdwg.mxu0
    %1156 = vmatprep.subr.bf16.mxu0 %v922
    %1157 = vmatpush1.bf16.msra.mxu0 %v921
    %1158 = vmatprep.subr.bf16.mxu0 %v926
    %1159 = vmatpush1.bf16.msra.mxu0 %v925
    %1160 = vmatprep.subr.bf16.mxu0 %v930
    %1161 = vmatpush1.bf16.msra.mxu0 %v929
    %1162 = vmatprep.subr.bf16.mxu0 %v934
    %1163 = vmatpush1.bf16.msra.mxu0 %v933
    %1164 = vmatprep.subr.bf16.mxu0 %v938
    %1165 = vmatpush1.bf16.msra.mxu0 %v937
    %1166 = vmatprep.subr.bf16.mxu0 %v942
    %1167 = vmatpush1.bf16.msra.mxu0 %v941
    %1168 = vmatprep.subr.bf16.mxu0 %v946
    %1169 = vmatpush1.bf16.msra.mxu0 %v945
    %1170 = vmatprep.subr.bf16.mxu0 %v950
    %1171 = vmatpush1.bf16.msra.mxu0 %v949
    %1172 = vmatprep.subr.bf16.mxu0 %v954
    %1173 = vmatpush1.bf16.msra.mxu0 %v953
    %1174 = vmatprep.subr.bf16.mxu0 %v958
    %1175 = vmatpush1.bf16.msra.mxu0 %v957
    %1176 = vmatprep.subr.bf16.mxu0 %v962
    %1177 = vmatpush1.bf16.msra.mxu0 %v961
    %1178 = vmatprep.subr.bf16.mxu0 %v966
    %1179 = vmatpush1.bf16.msra.mxu0 %v965
    %1180 = vmatprep.subr.bf16.mxu0 %v970
    %1181 = vmatpush1.bf16.msra.mxu0 %v969
    %1182 = vmatprep.subr.bf16.mxu0 %v974
    %1183 = vmatpush1.bf16.msra.mxu0 %v973
    %1184 = vmatprep.subr.bf16.mxu0 %v978
    %1185 = vmatpush1.bf16.msra.mxu0 %v977
    %1186 = vmatprep.subr.bf16.mxu0 %v982
    %1187 = vmatpush1.bf16.msra.mxu0 %v981
    %1188 = vmatprep.mubr.bf16.mxu0 %v322
    %1189 = vmatmul.mubr.bf16.gmra.mrb[0].mxu0 %v321
    %v1190 = vpop.f32.mrb[0].mxu0
    %v1191 = vadd.f32 %v1148, %v1190
    %v1192 = vpop.f32.mrb[0].mxu0
    %v1193 = vadd.f32 %v1150, %v1192
    %v1194 = vpop.f32.mrb[0].mxu0
    %v1195 = vadd.f32 %v1152, %v1194
    %v1196 = vpop.f32.mrb[0].mxu0
    %v1197 = vadd.f32 %v1154, %v1196
    %1198 = vdwg.mxu0
    %1199 = vmatprep.subr.bf16.mxu0 %v860
    %1200 = vmatpush1.bf16.msra.mxu0 %v859
    %1201 = vmatprep.subr.bf16.mxu0 %v864
    %1202 = vmatpush1.bf16.msra.mxu0 %v863
    %1203 = vmatprep.subr.bf16.mxu0 %v868
    %1204 = vmatpush1.bf16.msra.mxu0 %v867
    %1205 = vmatprep.subr.bf16.mxu0 %v872
    %1206 = vmatpush1.bf16.msra.mxu0 %v871
    %1207 = vmatprep.subr.bf16.mxu0 %v876
    %1208 = vmatpush1.bf16.msra.mxu0 %v875
    %1209 = vmatprep.subr.bf16.mxu0 %v880
    %1210 = vmatpush1.bf16.msra.mxu0 %v879
    %1211 = vmatprep.subr.bf16.mxu0 %v884
    %1212 = vmatpush1.bf16.msra.mxu0 %v883
    %1213 = vmatprep.subr.bf16.mxu0 %v888
    %1214 = vmatpush1.bf16.msra.mxu0 %v887
    %1215 = vmatprep.subr.bf16.mxu0 %v892
    %1216 = vmatpush1.bf16.msra.mxu0 %v891
    %1217 = vmatprep.subr.bf16.mxu0 %v896
    %1218 = vmatpush1.bf16.msra.mxu0 %v895
    %1219 = vmatprep.subr.bf16.mxu0 %v900
    %1220 = vmatpush1.bf16.msra.mxu0 %v899
    %1221 = vmatprep.subr.bf16.mxu0 %v904
    %1222 = vmatpush1.bf16.msra.mxu0 %v903
    %1223 = vmatprep.subr.bf16.mxu0 %v908
    %1224 = vmatpush1.bf16.msra.mxu0 %v907
    %1225 = vmatprep.subr.bf16.mxu0 %v912
    %1226 = vmatpush1.bf16.msra.mxu0 %v911
    %1227 = vmatprep.subr.bf16.mxu0 %v916
    %1228 = vmatpush1.bf16.msra.mxu0 %v915
    %1229 = vmatprep.subr.bf16.mxu0 %v920
    %1230 = vmatpush1.bf16.msra.mxu0 %v919
    %1231 = vmatprep.mubr.bf16.mxu0 %v320
    %1232 = vmatmul.mubr.bf16.gmra.mrb[0].mxu0 %v319
    %v1233 = vpop.f32.mrb[0].mxu0
    %v1234 = vadd.f32 %v464, %v1233
    %v1235 = vpop.f32.mrb[0].mxu0
    %v1236 = vadd.f32 %v468, %v1235
    %v1237 = vpop.f32.mrb[0].mxu0
    %v1238 = vadd.f32 %v464, %v1237
    %v1239 = vpop.f32.mrb[0].mxu0
    %v1240 = vadd.f32 %v468, %v1239
    %1241 = vdwg.mxu0
    %1242 = vmatprep.subr.bf16.mxu0 %v924
    %1243 = vmatpush1.bf16.msra.mxu0 %v923
    %1244 = vmatprep.subr.bf16.mxu0 %v928
    %1245 = vmatpush1.bf16.msra.mxu0 %v927
    %1246 = vmatprep.subr.bf16.mxu0 %v932
    %1247 = vmatpush1.bf16.msra.mxu0 %v931
    %1248 = vmatprep.subr.bf16.mxu0 %v936
    %1249 = vmatpush1.bf16.msra.mxu0 %v935
    %1250 = vmatprep.subr.bf16.mxu0 %v940
    %1251 = vmatpush1.bf16.msra.mxu0 %v939
    %1252 = vmatprep.subr.bf16.mxu0 %v944
    %1253 = vmatpush1.bf16.msra.mxu0 %v943
    %1254 = vmatprep.subr.bf16.mxu0 %v948
    %1255 = vmatpush1.bf16.msra.mxu0 %v947
    %1256 = vmatprep.subr.bf16.mxu0 %v952
    %1257 = vmatpush1.bf16.msra.mxu0 %v951
    %1258 = vmatprep.subr.bf16.mxu0 %v956
    %1259 = vmatpush1.bf16.msra.mxu0 %v955
    %1260 = vmatprep.subr.bf16.mxu0 %v960
    %1261 = vmatpush1.bf16.msra.mxu0 %v959
    %1262 = vmatprep.subr.bf16.mxu0 %v964
    %1263 = vmatpush1.bf16.msra.mxu0 %v963
    %1264 = vmatprep.subr.bf16.mxu0 %v968
    %1265 = vmatpush1.bf16.msra.mxu0 %v967
    %1266 = vmatprep.subr.bf16.mxu0 %v972
    %1267 = vmatpush1.bf16.msra.mxu0 %v971
    %1268 = vmatprep.subr.bf16.mxu0 %v976
    %1269 = vmatpush1.bf16.msra.mxu0 %v975
    %1270 = vmatprep.subr.bf16.mxu0 %v980
    %1271 = vmatpush1.bf16.msra.mxu0 %v979
    %1272 = vmatprep.subr.bf16.mxu0 %v984
    %1273 = vmatpush1.bf16.msra.mxu0 %v983
    %1274 = vmatprep.mubr.bf16.mxu0 %v322
    %1275 = vmatmul.mubr.bf16.gmra.mrb[0].mxu0 %v321
    %v1276 = vpop.f32.mrb[0].mxu0
    %v1277 = vadd.f32 %v1234, %v1276
    %v1278 = vpop.f32.mrb[0].mxu0
    %v1279 = vadd.f32 %v1236, %v1278
    %v1280 = vpop.f32.mrb[0].mxu0
    %v1281 = vadd.f32 %v1238, %v1280
    %v1282 = vpop.f32.mrb[0].mxu0
    %v1283 = vadd.f32 %v1240, %v1282
    %1284 = vdwg.mxu0
    %v1285 = vmax.f32 %v1191, 0.0
    %v1286 = vmax.f32 %v1193, 0.0
    %v1287 = vmax.f32 %v1277, 0.0
    %v1288 = vmax.f32 %v1279, 0.0
    %v1289 = vmax.f32 %v1195, 0.0
    %v1290 = vmax.f32 %v1197, 0.0
    %v1291 = vmax.f32 %v1281, 0.0
    %v1292 = vmax.f32 %v1283, 0.0
    %v1293 = vpack.c.bf16 %v1289, %v1285
    %v1294 = vpack.c.bf16 %v1290, %v1286
    %v1295 = vpack.c.bf16 %v1291, %v1287
    %v1296 = vpack.c.bf16 %v1292, %v1288
    %v1297 = vld [vmem:[#allocation7] sm:$0xff]
    %v1298 = vld [vmem:[#allocation7 + $0x8] sm:$0xff]
    %v1299 = vld [vmem:[#allocation7 + $0x10] sm:$0xff]
    %v1300 = vld [vmem:[#allocation7 + $0x18] sm:$0xff]
    %v1301 = vld [vmem:[#allocation7 + $0x20] sm:$0xff]
    %v1302 = vld [vmem:[#allocation7 + $0x28] sm:$0xff]
    %v1303 = vld [vmem:[#allocation7 + $0x30] sm:$0xff]
    %v1304 = vld [vmem:[#allocation7 + $0x38] sm:$0xff]
    %v1305 = vld [vmem:[#allocation7 + $0x40] sm:$0xff]
    %v1306 = vld [vmem:[#allocation7 + $0x48] sm:$0xff]
    %v1307 = vld [vmem:[#allocation7 + $0x50] sm:$0xff]
    %v1308 = vld [vmem:[#allocation7 + $0x58] sm:$0xff]
    %v1309 = vld [vmem:[#allocation7 + $0x60] sm:$0xff]
    %v1310 = vld [vmem:[#allocation7 + $0x68] sm:$0xff]
    %v1311 = vld [vmem:[#allocation7 + $0x70] sm:$0xff]
    %v1312 = vld [vmem:[#allocation7 + $0x78] sm:$0xff]
    %v1313 = vld [vmem:[#allocation7 + $0x80] sm:$0xff]
    %v1314 = vld [vmem:[#allocation7 + $0x88] sm:$0xff]
    %v1315 = vld [vmem:[#allocation7 + $0x90] sm:$0xff]
    %v1316 = vld [vmem:[#allocation7 + $0x98] sm:$0xff]
    %v1317 = vld [vmem:[#allocation7 + $0xa0] sm:$0xff]
    %v1318 = vld [vmem:[#allocation7 + $0xa8] sm:$0xff]
    %v1319 = vld [vmem:[#allocation7 + $0xb0] sm:$0xff]
    %v1320 = vld [vmem:[#allocation7 + $0xb8] sm:$0xff]
    %v1321 = vld [vmem:[#allocation7 + $0xc0] sm:$0xff]
    %v1322 = vld [vmem:[#allocation7 + $0xc8] sm:$0xff]
    %v1323 = vld [vmem:[#allocation7 + $0xd0] sm:$0xff]
    %v1324 = vld [vmem:[#allocation7 + $0xd8] sm:$0xff]
    %v1325 = vld [vmem:[#allocation7 + $0xe0] sm:$0xff]
    %v1326 = vld [vmem:[#allocation7 + $0xe8] sm:$0xff]
    %v1327 = vld [vmem:[#allocation7 + $0xf0] sm:$0xff]
    %v1328 = vld [vmem:[#allocation7 + $0xf8] sm:$0xff]
    %v1329 = vld [vmem:[#allocation7 + $0x100] sm:$0xff]
    %v1330 = vld [vmem:[#allocation7 + $0x108] sm:$0xff]
    %v1331 = vld [vmem:[#allocation7 + $0x110] sm:$0xff]
    %v1332 = vld [vmem:[#allocation7 + $0x118] sm:$0xff]
    %v1333 = vld [vmem:[#allocation7 + $0x120] sm:$0xff]
    %v1334 = vld [vmem:[#allocation7 + $0x128] sm:$0xff]
    %v1335 = vld [vmem:[#allocation7 + $0x130] sm:$0xff]
    %v1336 = vld [vmem:[#allocation7 + $0x138] sm:$0xff]
    %v1337 = vld [vmem:[#allocation7 + $0x140] sm:$0xff]
    %v1338 = vld [vmem:[#allocation7 + $0x148] sm:$0xff]
    %v1339 = vld [vmem:[#allocation7 + $0x150] sm:$0xff]
    %v1340 = vld [vmem:[#allocation7 + $0x158] sm:$0xff]
    %v1341 = vld [vmem:[#allocation7 + $0x160] sm:$0xff]
    %v1342 = vld [vmem:[#allocation7 + $0x168] sm:$0xff]
    %v1343 = vld [vmem:[#allocation7 + $0x170] sm:$0xff]
    %v1344 = vld [vmem:[#allocation7 + $0x178] sm:$0xff]
    %v1345 = vld [vmem:[#allocation7 + $0x180] sm:$0xff]
    %v1346 = vld [vmem:[#allocation7 + $0x188] sm:$0xff]
    %v1347 = vld [vmem:[#allocation7 + $0x190] sm:$0xff]
    %v1348 = vld [vmem:[#allocation7 + $0x198] sm:$0xff]
    %v1349 = vld [vmem:[#allocation7 + $0x1a0] sm:$0xff]
    %v1350 = vld [vmem:[#allocation7 + $0x1a8] sm:$0xff]
    %v1351 = vld [vmem:[#allocation7 + $0x1b0] sm:$0xff]
    %v1352 = vld [vmem:[#allocation7 + $0x1b8] sm:$0xff]
    %v1353 = vld [vmem:[#allocation7 + $0x1c0] sm:$0xff]
    %v1354 = vld [vmem:[#allocation7 + $0x1c8] sm:$0xff]
    %v1355 = vld [vmem:[#allocation7 + $0x1d0] sm:$0xff]
    %v1356 = vld [vmem:[#allocation7 + $0x1d8] sm:$0xff]
    %v1357 = vld [vmem:[#allocation7 + $0x1e0] sm:$0xff]
    %v1358 = vld [vmem:[#allocation7 + $0x1e8] sm:$0xff]
    %v1359 = vld [vmem:[#allocation7 + $0x1f0] sm:$0xff]
    %v1360 = vld [vmem:[#allocation7 + $0x1f8] sm:$0xff]
    %v1361 = vld [vmem:[#allocation7 + $0x200] sm:$0xff]
    %v1362 = vld [vmem:[#allocation7 + $0x208] sm:$0xff]
    %v1363 = vld [vmem:[#allocation7 + $0x210] sm:$0xff]
    %v1364 = vld [vmem:[#allocation7 + $0x218] sm:$0xff]
    %v1365 = vld [vmem:[#allocation7 + $0x220] sm:$0xff]
    %v1366 = vld [vmem:[#allocation7 + $0x228] sm:$0xff]
    %v1367 = vld [vmem:[#allocation7 + $0x230] sm:$0xff]
    %v1368 = vld [vmem:[#allocation7 + $0x238] sm:$0xff]
    %v1369 = vld [vmem:[#allocation7 + $0x240] sm:$0xff]
    %v1370 = vld [vmem:[#allocation7 + $0x248] sm:$0xff]
    %v1371 = vld [vmem:[#allocation7 + $0x250] sm:$0xff]
    %v1372 = vld [vmem:[#allocation7 + $0x258] sm:$0xff]
    %v1373 = vld [vmem:[#allocation7 + $0x260] sm:$0xff]
    %v1374 = vld [vmem:[#allocation7 + $0x268] sm:$0xff]
    %v1375 = vld [vmem:[#allocation7 + $0x270] sm:$0xff]
    %v1376 = vld [vmem:[#allocation7 + $0x278] sm:$0xff]
    %v1377 = vld [vmem:[#allocation7 + $0x280] sm:$0xff]
    %v1378 = vld [vmem:[#allocation7 + $0x288] sm:$0xff]
    %v1379 = vld [vmem:[#allocation7 + $0x290] sm:$0xff]
    %v1380 = vld [vmem:[#allocation7 + $0x298] sm:$0xff]
    %v1381 = vld [vmem:[#allocation7 + $0x2a0] sm:$0xff]
    %v1382 = vld [vmem:[#allocation7 + $0x2a8] sm:$0xff]
    %v1383 = vld [vmem:[#allocation7 + $0x2b0] sm:$0xff]
    %v1384 = vld [vmem:[#allocation7 + $0x2b8] sm:$0xff]
    %v1385 = vld [vmem:[#allocation7 + $0x2c0] sm:$0xff]
    %v1386 = vld [vmem:[#allocation7 + $0x2c8] sm:$0xff]
    %v1387 = vld [vmem:[#allocation7 + $0x2d0] sm:$0xff]
    %v1388 = vld [vmem:[#allocation7 + $0x2d8] sm:$0xff]
    %v1389 = vld [vmem:[#allocation7 + $0x2e0] sm:$0xff]
    %v1390 = vld [vmem:[#allocation7 + $0x2e8] sm:$0xff]
    %v1391 = vld [vmem:[#allocation7 + $0x2f0] sm:$0xff]
    %v1392 = vld [vmem:[#allocation7 + $0x2f8] sm:$0xff]
    %v1393 = vld [vmem:[#allocation7 + $0x300] sm:$0xff]
    %v1394 = vld [vmem:[#allocation7 + $0x308] sm:$0xff]
    %v1395 = vld [vmem:[#allocation7 + $0x310] sm:$0xff]
    %v1396 = vld [vmem:[#allocation7 + $0x318] sm:$0xff]
    %v1397 = vld [vmem:[#allocation7 + $0x320] sm:$0xff]
    %v1398 = vld [vmem:[#allocation7 + $0x328] sm:$0xff]
    %v1399 = vld [vmem:[#allocation7 + $0x330] sm:$0xff]
    %v1400 = vld [vmem:[#allocation7 + $0x338] sm:$0xff]
    %v1401 = vld [vmem:[#allocation7 + $0x340] sm:$0xff]
    %v1402 = vld [vmem:[#allocation7 + $0x348] sm:$0xff]
    %v1403 = vld [vmem:[#allocation7 + $0x350] sm:$0xff]
    %v1404 = vld [vmem:[#allocation7 + $0x358] sm:$0xff]
    %v1405 = vld [vmem:[#allocation7 + $0x360] sm:$0xff]
    %v1406 = vld [vmem:[#allocation7 + $0x368] sm:$0xff]
    %v1407 = vld [vmem:[#allocation7 + $0x370] sm:$0xff]
    %v1408 = vld [vmem:[#allocation7 + $0x378] sm:$0xff]
    %v1409 = vld [vmem:[#allocation7 + $0x380] sm:$0xff]
    %v1410 = vld [vmem:[#allocation7 + $0x388] sm:$0xff]
    %v1411 = vld [vmem:[#allocation7 + $0x390] sm:$0xff]
    %v1412 = vld [vmem:[#allocation7 + $0x398] sm:$0xff]
    %v1413 = vld [vmem:[#allocation7 + $0x3a0] sm:$0xff]
    %v1414 = vld [vmem:[#allocation7 + $0x3a8] sm:$0xff]
    %v1415 = vld [vmem:[#allocation7 + $0x3b0] sm:$0xff]
    %v1416 = vld [vmem:[#allocation7 + $0x3b8] sm:$0xff]
    %v1417 = vld [vmem:[#allocation7 + $0x3c0] sm:$0xff]
    %v1418 = vld [vmem:[#allocation7 + $0x3c8] sm:$0xff]
    %v1419 = vld [vmem:[#allocation7 + $0x3d0] sm:$0xff]
    %v1420 = vld [vmem:[#allocation7 + $0x3d8] sm:$0xff]
    %v1421 = vld [vmem:[#allocation7 + $0x3e0] sm:$0xff]
    %v1422 = vld [vmem:[#allocation7 + $0x3e8] sm:$0xff]
    %v1423 = vld [vmem:[#allocation7 + $0x3f0] sm:$0xff]
    %v1424 = vld [vmem:[#allocation7 + $0x3f8] sm:$0xff]
    %v1425 = vld [vmem:[%s6] sm:$0xf]
    %v1427 = vlaneseq
    %v1428 = vshrl.u32 %v1427, 7
    %v1429 = vsub.s32 0, %v1428
    %v1430 = vrot.slane %v1425, %v1429
    %v1431 = vlaneseq
    %v1432 = vshrl.u32 %v1431, 7
    %v1433 = vsub.s32 1, %v1432
    %v1434 = vrot.slane %v1425, %v1433
    %v1435 = vlaneseq
    %v1436 = vshrl.u32 %v1435, 7
    %v1437 = vsub.s32 2, %v1436
    %v1438 = vrot.slane %v1425, %v1437
    %v1439 = vlaneseq
    %v1440 = vshrl.u32 %v1439, 7
    %v1441 = vsub.s32 3, %v1440
    %v1442 = vrot.slane %v1425, %v1441
    %v1575 = vunpack.c.l.b16 %v1297
    %v1576 = vunpack.c.h.b16 %v1297
    %v1577 = vunpack.c.l.b16 %v1298
    %v1578 = vunpack.c.h.b16 %v1298
    %v1579 = vunpack.c.l.b16 %v1299
    %v1580 = vunpack.c.h.b16 %v1299
    %v1581 = vunpack.c.l.b16 %v1300
    %v1582 = vunpack.c.h.b16 %v1300
    %v1583 = vunpack.c.l.b16 %v1301
    %v1584 = vunpack.c.h.b16 %v1301
    %v1585 = vunpack.c.l.b16 %v1302
    %v1586 = vunpack.c.h.b16 %v1302
    %v1587 = vunpack.c.l.b16 %v1303
    %v1588 = vunpack.c.h.b16 %v1303
    %v1589 = vunpack.c.l.b16 %v1304
    %v1590 = vunpack.c.h.b16 %v1304
    %v1591 = vunpack.c.l.b16 %v1305
    %v1592 = vunpack.c.h.b16 %v1305
    %v1593 = vunpack.c.l.b16 %v1306
    %v1594 = vunpack.c.h.b16 %v1306
    %v1595 = vunpack.c.l.b16 %v1307
    %v1596 = vunpack.c.h.b16 %v1307
    %v1597 = vunpack.c.l.b16 %v1308
    %v1598 = vunpack.c.h.b16 %v1308
    %v1599 = vunpack.c.l.b16 %v1309
    %v1600 = vunpack.c.h.b16 %v1309
    %v1601 = vunpack.c.l.b16 %v1310
    %v1602 = vunpack.c.h.b16 %v1310
    %v1603 = vunpack.c.l.b16 %v1311
    %v1604 = vunpack.c.h.b16 %v1311
    %v1605 = vunpack.c.l.b16 %v1312
    %v1606 = vunpack.c.h.b16 %v1312
    %v1607 = vunpack.c.l.b16 %v1313
    %v1608 = vunpack.c.h.b16 %v1313
    %v1609 = vunpack.c.l.b16 %v1314
    %v1610 = vunpack.c.h.b16 %v1314
    %v1611 = vunpack.c.l.b16 %v1315
    %v1612 = vunpack.c.h.b16 %v1315
    %v1613 = vunpack.c.l.b16 %v1316
    %v1614 = vunpack.c.h.b16 %v1316
    %v1615 = vunpack.c.l.b16 %v1317
    %v1616 = vunpack.c.h.b16 %v1317
    %v1617 = vunpack.c.l.b16 %v1318
    %v1618 = vunpack.c.h.b16 %v1318
    %v1619 = vunpack.c.l.b16 %v1319
    %v1620 = vunpack.c.h.b16 %v1319
    %v1621 = vunpack.c.l.b16 %v1320
    %v1622 = vunpack.c.h.b16 %v1320
    %v1623 = vunpack.c.l.b16 %v1321
    %v1624 = vunpack.c.h.b16 %v1321
    %v1625 = vunpack.c.l.b16 %v1322
    %v1626 = vunpack.c.h.b16 %v1322
    %v1627 = vunpack.c.l.b16 %v1323
    %v1628 = vunpack.c.h.b16 %v1323
    %v1629 = vunpack.c.l.b16 %v1324
    %v1630 = vunpack.c.h.b16 %v1324
    %v1631 = vunpack.c.l.b16 %v1325
    %v1632 = vunpack.c.h.b16 %v1325
    %v1633 = vunpack.c.l.b16 %v1326
    %v1634 = vunpack.c.h.b16 %v1326
    %v1635 = vunpack.c.l.b16 %v1327
    %v1636 = vunpack.c.h.b16 %v1327
    %v1637 = vunpack.c.l.b16 %v1328
    %v1638 = vunpack.c.h.b16 %v1328
    %v1639 = vunpack.c.l.b16 %v1329
    %v1640 = vunpack.c.h.b16 %v1329
    %v1641 = vunpack.c.l.b16 %v1330
    %v1642 = vunpack.c.h.b16 %v1330
    %v1643 = vunpack.c.l.b16 %v1331
    %v1644 = vunpack.c.h.b16 %v1331
    %v1645 = vunpack.c.l.b16 %v1332
    %v1646 = vunpack.c.h.b16 %v1332
    %v1647 = vunpack.c.l.b16 %v1333
    %v1648 = vunpack.c.h.b16 %v1333
    %v1649 = vunpack.c.l.b16 %v1334
    %v1650 = vunpack.c.h.b16 %v1334
    %v1651 = vunpack.c.l.b16 %v1335
    %v1652 = vunpack.c.h.b16 %v1335
    %v1653 = vunpack.c.l.b16 %v1336
    %v1654 = vunpack.c.h.b16 %v1336
    %v1655 = vunpack.c.l.b16 %v1337
    %v1656 = vunpack.c.h.b16 %v1337
    %v1657 = vunpack.c.l.b16 %v1338
    %v1658 = vunpack.c.h.b16 %v1338
    %v1659 = vunpack.c.l.b16 %v1339
    %v1660 = vunpack.c.h.b16 %v1339
    %v1661 = vunpack.c.l.b16 %v1340
    %v1662 = vunpack.c.h.b16 %v1340
    %v1663 = vunpack.c.l.b16 %v1341
    %v1664 = vunpack.c.h.b16 %v1341
    %v1665 = vunpack.c.l.b16 %v1342
    %v1666 = vunpack.c.h.b16 %v1342
    %v1667 = vunpack.c.l.b16 %v1343
    %v1668 = vunpack.c.h.b16 %v1343
    %v1669 = vunpack.c.l.b16 %v1344
    %v1670 = vunpack.c.h.b16 %v1344
    %v1671 = vunpack.c.l.b16 %v1345
    %v1672 = vunpack.c.h.b16 %v1345
    %v1673 = vunpack.c.l.b16 %v1346
    %v1674 = vunpack.c.h.b16 %v1346
    %v1675 = vunpack.c.l.b16 %v1347
    %v1676 = vunpack.c.h.b16 %v1347
    %v1677 = vunpack.c.l.b16 %v1348
    %v1678 = vunpack.c.h.b16 %v1348
    %v1679 = vunpack.c.l.b16 %v1349
    %v1680 = vunpack.c.h.b16 %v1349
    %v1681 = vunpack.c.l.b16 %v1350
    %v1682 = vunpack.c.h.b16 %v1350
    %v1683 = vunpack.c.l.b16 %v1351
    %v1684 = vunpack.c.h.b16 %v1351
    %v1685 = vunpack.c.l.b16 %v1352
    %v1686 = vunpack.c.h.b16 %v1352
    %v1687 = vunpack.c.l.b16 %v1353
    %v1688 = vunpack.c.h.b16 %v1353
    %v1689 = vunpack.c.l.b16 %v1354
    %v1690 = vunpack.c.h.b16 %v1354
    %v1691 = vunpack.c.l.b16 %v1355
    %v1692 = vunpack.c.h.b16 %v1355
    %v1693 = vunpack.c.l.b16 %v1356
    %v1694 = vunpack.c.h.b16 %v1356
    %v1695 = vunpack.c.l.b16 %v1357
    %v1696 = vunpack.c.h.b16 %v1357
    %v1697 = vunpack.c.l.b16 %v1358
    %v1698 = vunpack.c.h.b16 %v1358
    %v1699 = vunpack.c.l.b16 %v1359
    %v1700 = vunpack.c.h.b16 %v1359
    %v1701 = vunpack.c.l.b16 %v1360
    %v1702 = vunpack.c.h.b16 %v1360
    %v1703 = vunpack.c.l.b16 %v1361
    %v1704 = vunpack.c.h.b16 %v1361
    %v1705 = vunpack.c.l.b16 %v1362
    %v1706 = vunpack.c.h.b16 %v1362
    %v1707 = vunpack.c.l.b16 %v1363
    %v1708 = vunpack.c.h.b16 %v1363
    %v1709 = vunpack.c.l.b16 %v1364
    %v1710 = vunpack.c.h.b16 %v1364
    %v1711 = vunpack.c.l.b16 %v1365
    %v1712 = vunpack.c.h.b16 %v1365
    %v1713 = vunpack.c.l.b16 %v1366
    %v1714 = vunpack.c.h.b16 %v1366
    %v1715 = vunpack.c.l.b16 %v1367
    %v1716 = vunpack.c.h.b16 %v1367
    %v1717 = vunpack.c.l.b16 %v1368
    %v1718 = vunpack.c.h.b16 %v1368
    %v1719 = vunpack.c.l.b16 %v1369
    %v1720 = vunpack.c.h.b16 %v1369
    %v1721 = vunpack.c.l.b16 %v1370
    %v1722 = vunpack.c.h.b16 %v1370
    %v1723 = vunpack.c.l.b16 %v1371
    %v1724 = vunpack.c.h.b16 %v1371
    %v1725 = vunpack.c.l.b16 %v1372
    %v1726 = vunpack.c.h.b16 %v1372
    %v1727 = vunpack.c.l.b16 %v1373
    %v1728 = vunpack.c.h.b16 %v1373
    %v1729 = vunpack.c.l.b16 %v1374
    %v1730 = vunpack.c.h.b16 %v1374
    %v1731 = vunpack.c.l.b16 %v1375
    %v1732 = vunpack.c.h.b16 %v1375
    %v1733 = vunpack.c.l.b16 %v1376
    %v1734 = vunpack.c.h.b16 %v1376
    %v1735 = vunpack.c.l.b16 %v1377
    %v1736 = vunpack.c.h.b16 %v1377
    %v1737 = vunpack.c.l.b16 %v1378
    %v1738 = vunpack.c.h.b16 %v1378
    %v1739 = vunpack.c.l.b16 %v1379
    %v1740 = vunpack.c.h.b16 %v1379
    %v1741 = vunpack.c.l.b16 %v1380
    %v1742 = vunpack.c.h.b16 %v1380
    %v1743 = vunpack.c.l.b16 %v1381
    %v1744 = vunpack.c.h.b16 %v1381
    %v1745 = vunpack.c.l.b16 %v1382
    %v1746 = vunpack.c.h.b16 %v1382
    %v1747 = vunpack.c.l.b16 %v1383
    %v1748 = vunpack.c.h.b16 %v1383
    %v1749 = vunpack.c.l.b16 %v1384
    %v1750 = vunpack.c.h.b16 %v1384
    %v1751 = vunpack.c.l.b16 %v1385
    %v1752 = vunpack.c.h.b16 %v1385
    %v1753 = vunpack.c.l.b16 %v1386
    %v1754 = vunpack.c.h.b16 %v1386
    %v1755 = vunpack.c.l.b16 %v1387
    %v1756 = vunpack.c.h.b16 %v1387
    %v1757 = vunpack.c.l.b16 %v1388
    %v1758 = vunpack.c.h.b16 %v1388
    %v1759 = vunpack.c.l.b16 %v1389
    %v1760 = vunpack.c.h.b16 %v1389
    %v1761 = vunpack.c.l.b16 %v1390
    %v1762 = vunpack.c.h.b16 %v1390
    %v1763 = vunpack.c.l.b16 %v1391
    %v1764 = vunpack.c.h.b16 %v1391
    %v1765 = vunpack.c.l.b16 %v1392
    %v1766 = vunpack.c.h.b16 %v1392
    %v1767 = vunpack.c.l.b16 %v1393
    %v1768 = vunpack.c.h.b16 %v1393
    %v1769 = vunpack.c.l.b16 %v1394
    %v1770 = vunpack.c.h.b16 %v1394
    %v1771 = vunpack.c.l.b16 %v1395
    %v1772 = vunpack.c.h.b16 %v1395
    %v1773 = vunpack.c.l.b16 %v1396
    %v1774 = vunpack.c.h.b16 %v1396
    %v1775 = vunpack.c.l.b16 %v1397
    %v1776 = vunpack.c.h.b16 %v1397
    %v1777 = vunpack.c.l.b16 %v1398
    %v1778 = vunpack.c.h.b16 %v1398
    %v1779 = vunpack.c.l.b16 %v1399
    %v1780 = vunpack.c.h.b16 %v1399
    %v1781 = vunpack.c.l.b16 %v1400
    %v1782 = vunpack.c.h.b16 %v1400
    %v1783 = vunpack.c.l.b16 %v1401
    %v1784 = vunpack.c.h.b16 %v1401
    %v1785 = vunpack.c.l.b16 %v1402
    %v1786 = vunpack.c.h.b16 %v1402
    %v1787 = vunpack.c.l.b16 %v1403
    %v1788 = vunpack.c.h.b16 %v1403
    %v1789 = vunpack.c.l.b16 %v1404
    %v1790 = vunpack.c.h.b16 %v1404
    %v1791 = vunpack.c.l.b16 %v1405
    %v1792 = vunpack.c.h.b16 %v1405
    %v1793 = vunpack.c.l.b16 %v1406
    %v1794 = vunpack.c.h.b16 %v1406
    %v1795 = vunpack.c.l.b16 %v1407
    %v1796 = vunpack.c.h.b16 %v1407
    %v1797 = vunpack.c.l.b16 %v1408
    %v1798 = vunpack.c.h.b16 %v1408
    %v1799 = vunpack.c.l.b16 %v1409
    %v1800 = vunpack.c.h.b16 %v1409
    %v1801 = vunpack.c.l.b16 %v1410
    %v1802 = vunpack.c.h.b16 %v1410
    %v1803 = vunpack.c.l.b16 %v1411
    %v1804 = vunpack.c.h.b16 %v1411
    %v1805 = vunpack.c.l.b16 %v1412
    %v1806 = vunpack.c.h.b16 %v1412
    %v1807 = vunpack.c.l.b16 %v1413
    %v1808 = vunpack.c.h.b16 %v1413
    %v1809 = vunpack.c.l.b16 %v1414
    %v1810 = vunpack.c.h.b16 %v1414
    %v1811 = vunpack.c.l.b16 %v1415
    %v1812 = vunpack.c.h.b16 %v1415
    %v1813 = vunpack.c.l.b16 %v1416
    %v1814 = vunpack.c.h.b16 %v1416
    %v1815 = vunpack.c.l.b16 %v1417
    %v1816 = vunpack.c.h.b16 %v1417
    %v1817 = vunpack.c.l.b16 %v1418
    %v1818 = vunpack.c.h.b16 %v1418
    %v1819 = vunpack.c.l.b16 %v1419
    %v1820 = vunpack.c.h.b16 %v1419
    %v1821 = vunpack.c.l.b16 %v1420
    %v1822 = vunpack.c.h.b16 %v1420
    %v1823 = vunpack.c.l.b16 %v1421
    %v1824 = vunpack.c.h.b16 %v1421
    %v1825 = vunpack.c.l.b16 %v1422
    %v1826 = vunpack.c.h.b16 %v1422
    %v1827 = vunpack.c.l.b16 %v1423
    %v1828 = vunpack.c.h.b16 %v1423
    %v1829 = vunpack.c.l.b16 %v1424
    %v1830 = vunpack.c.h.b16 %v1424
    %v1831 = vpack.c.b16 %v1579, %v1575
    %v1832 = vpack.c.b16 %v1580, %v1576
    %v1833 = vpack.c.b16 %v1581, %v1577
    %v1834 = vpack.c.b16 %v1582, %v1578
    %v1835 = vpack.c.b16 %v1587, %v1583
    %v1836 = vpack.c.b16 %v1588, %v1584
    %v1837 = vpack.c.b16 %v1589, %v1585
    %v1838 = vpack.c.b16 %v1590, %v1586
    %v1839 = vpack.c.b16 %v1595, %v1591
    %v1840 = vpack.c.b16 %v1596, %v1592
    %v1841 = vpack.c.b16 %v1597, %v1593
    %v1842 = vpack.c.b16 %v1598, %v1594
    %v1843 = vpack.c.b16 %v1603, %v1599
    %v1844 = vpack.c.b16 %v1604, %v1600
    %v1845 = vpack.c.b16 %v1605, %v1601
    %v1846 = vpack.c.b16 %v1606, %v1602
    %v1847 = vpack.c.b16 %v1611, %v1607
    %v1848 = vpack.c.b16 %v1612, %v1608
    %v1849 = vpack.c.b16 %v1613, %v1609
    %v1850 = vpack.c.b16 %v1614, %v1610
    %v1851 = vpack.c.b16 %v1619, %v1615
    %v1852 = vpack.c.b16 %v1620, %v1616
    %v1853 = vpack.c.b16 %v1621, %v1617
    %v1854 = vpack.c.b16 %v1622, %v1618
    %v1855 = vpack.c.b16 %v1627, %v1623
    %v1856 = vpack.c.b16 %v1628, %v1624
    %v1857 = vpack.c.b16 %v1629, %v1625
    %v1858 = vpack.c.b16 %v1630, %v1626
    %v1859 = vpack.c.b16 %v1635, %v1631
    %v1860 = vpack.c.b16 %v1636, %v1632
    %v1861 = vpack.c.b16 %v1637, %v1633
    %v1862 = vpack.c.b16 %v1638, %v1634
    %v1863 = vpack.c.b16 %v1643, %v1639
    %v1864 = vpack.c.b16 %v1644, %v1640
    %v1865 = vpack.c.b16 %v1645, %v1641
    %v1866 = vpack.c.b16 %v1646, %v1642
    %v1867 = vpack.c.b16 %v1651, %v1647
    %v1868 = vpack.c.b16 %v1652, %v1648
    %v1869 = vpack.c.b16 %v1653, %v1649
    %v1870 = vpack.c.b16 %v1654, %v1650
    %v1871 = vpack.c.b16 %v1659, %v1655
    %v1872 = vpack.c.b16 %v1660, %v1656
    %v1873 = vpack.c.b16 %v1661, %v1657
    %v1874 = vpack.c.b16 %v1662, %v1658
    %v1875 = vpack.c.b16 %v1667, %v1663
    %v1876 = vpack.c.b16 %v1668, %v1664
    %v1877 = vpack.c.b16 %v1669, %v1665
    %v1878 = vpack.c.b16 %v1670, %v1666
    %v1879 = vpack.c.b16 %v1675, %v1671
    %v1880 = vpack.c.b16 %v1676, %v1672
    %v1881 = vpack.c.b16 %v1677, %v1673
    %v1882 = vpack.c.b16 %v1678, %v1674
    %v1883 = vpack.c.b16 %v1683, %v1679
    %v1884 = vpack.c.b16 %v1684, %v1680
    %v1885 = vpack.c.b16 %v1685, %v1681
    %v1886 = vpack.c.b16 %v1686, %v1682
    %v1887 = vpack.c.b16 %v1691, %v1687
    %v1888 = vpack.c.b16 %v1692, %v1688
    %v1889 = vpack.c.b16 %v1693, %v1689
    %v1890 = vpack.c.b16 %v1694, %v1690
    %v1891 = vpack.c.b16 %v1699, %v1695
    %v1892 = vpack.c.b16 %v1700, %v1696
    %v1893 = vpack.c.b16 %v1701, %v1697
    %v1894 = vpack.c.b16 %v1702, %v1698
    %v1895 = vpack.c.b16 %v1707, %v1703
    %v1896 = vpack.c.b16 %v1708, %v1704
    %v1897 = vpack.c.b16 %v1709, %v1705
    %v1898 = vpack.c.b16 %v1710, %v1706
    %v1899 = vpack.c.b16 %v1715, %v1711
    %v1900 = vpack.c.b16 %v1716, %v1712
    %v1901 = vpack.c.b16 %v1717, %v1713
    %v1902 = vpack.c.b16 %v1718, %v1714
    %v1903 = vpack.c.b16 %v1723, %v1719
    %v1904 = vpack.c.b16 %v1724, %v1720
    %v1905 = vpack.c.b16 %v1725, %v1721
    %v1906 = vpack.c.b16 %v1726, %v1722
    %v1907 = vpack.c.b16 %v1731, %v1727
    %v1908 = vpack.c.b16 %v1732, %v1728
    %v1909 = vpack.c.b16 %v1733, %v1729
    %v1910 = vpack.c.b16 %v1734, %v1730
    %v1911 = vpack.c.b16 %v1739, %v1735
    %v1912 = vpack.c.b16 %v1740, %v1736
    %v1913 = vpack.c.b16 %v1741, %v1737
    %v1914 = vpack.c.b16 %v1742, %v1738
    %v1915 = vpack.c.b16 %v1747, %v1743
    %v1916 = vpack.c.b16 %v1748, %v1744
    %v1917 = vpack.c.b16 %v1749, %v1745
    %v1918 = vpack.c.b16 %v1750, %v1746
    %v1919 = vpack.c.b16 %v1755, %v1751
    %v1920 = vpack.c.b16 %v1756, %v1752
    %v1921 = vpack.c.b16 %v1757, %v1753
    %v1922 = vpack.c.b16 %v1758, %v1754
    %v1923 = vpack.c.b16 %v1763, %v1759
    %v1924 = vpack.c.b16 %v1764, %v1760
    %v1925 = vpack.c.b16 %v1765, %v1761
    %v1926 = vpack.c.b16 %v1766, %v1762
    %v1927 = vpack.c.b16 %v1771, %v1767
    %v1928 = vpack.c.b16 %v1772, %v1768
    %v1929 = vpack.c.b16 %v1773, %v1769
    %v1930 = vpack.c.b16 %v1774, %v1770
    %v1931 = vpack.c.b16 %v1779, %v1775
    %v1932 = vpack.c.b16 %v1780, %v1776
    %v1933 = vpack.c.b16 %v1781, %v1777
    %v1934 = vpack.c.b16 %v1782, %v1778
    %v1935 = vpack.c.b16 %v1787, %v1783
    %v1936 = vpack.c.b16 %v1788, %v1784
    %v1937 = vpack.c.b16 %v1789, %v1785
    %v1938 = vpack.c.b16 %v1790, %v1786
    %v1939 = vpack.c.b16 %v1795, %v1791
    %v1940 = vpack.c.b16 %v1796, %v1792
    %v1941 = vpack.c.b16 %v1797, %v1793
    %v1942 = vpack.c.b16 %v1798, %v1794
    %v1943 = vpack.c.b16 %v1803, %v1799
    %v1944 = vpack.c.b16 %v1804, %v1800
    %v1945 = vpack.c.b16 %v1805, %v1801
    %v1946 = vpack.c.b16 %v1806, %v1802
    %v1947 = vpack.c.b16 %v1811, %v1807
    %v1948 = vpack.c.b16 %v1812, %v1808
    %v1949 = vpack.c.b16 %v1813, %v1809
    %v1950 = vpack.c.b16 %v1814, %v1810
    %v1951 = vpack.c.b16 %v1819, %v1815
    %v1952 = vpack.c.b16 %v1820, %v1816
    %v1953 = vpack.c.b16 %v1821, %v1817
    %v1954 = vpack.c.b16 %v1822, %v1818
    %v1955 = vpack.c.b16 %v1827, %v1823
    %v1956 = vpack.c.b16 %v1828, %v1824
    %v1957 = vpack.c.b16 %v1829, %v1825
    %v1958 = vpack.c.b16 %v1830, %v1826
    %2087 = vmatprep.subr.bf16.mxu0 %v1832
    %2088 = vmatpush1.bf16.msra.mxu0 %v1831
    %2089 = vmatprep.subr.bf16.mxu0 %v1836
    %2090 = vmatpush1.bf16.msra.mxu0 %v1835
    %2091 = vmatprep.subr.bf16.mxu0 %v1840
    %2092 = vmatpush1.bf16.msra.mxu0 %v1839
    %2093 = vmatprep.subr.bf16.mxu0 %v1844
    %2094 = vmatpush1.bf16.msra.mxu0 %v1843
    %2095 = vmatprep.subr.bf16.mxu0 %v1848
    %2096 = vmatpush1.bf16.msra.mxu0 %v1847
    %2097 = vmatprep.subr.bf16.mxu0 %v1852
    %2098 = vmatpush1.bf16.msra.mxu0 %v1851
    %2099 = vmatprep.subr.bf16.mxu0 %v1856
    %2100 = vmatpush1.bf16.msra.mxu0 %v1855
    %2101 = vmatprep.subr.bf16.mxu0 %v1860
    %2102 = vmatpush1.bf16.msra.mxu0 %v1859
    %2103 = vmatprep.subr.bf16.mxu0 %v1864
    %2104 = vmatpush1.bf16.msra.mxu0 %v1863
    %2105 = vmatprep.subr.bf16.mxu0 %v1868
    %2106 = vmatpush1.bf16.msra.mxu0 %v1867
    %2107 = vmatprep.subr.bf16.mxu0 %v1872
    %2108 = vmatpush1.bf16.msra.mxu0 %v1871
    %2109 = vmatprep.subr.bf16.mxu0 %v1876
    %2110 = vmatpush1.bf16.msra.mxu0 %v1875
    %2111 = vmatprep.subr.bf16.mxu0 %v1880
    %2112 = vmatpush1.bf16.msra.mxu0 %v1879
    %2113 = vmatprep.subr.bf16.mxu0 %v1884
    %2114 = vmatpush1.bf16.msra.mxu0 %v1883
    %2115 = vmatprep.subr.bf16.mxu0 %v1888
    %2116 = vmatpush1.bf16.msra.mxu0 %v1887
    %2117 = vmatprep.subr.bf16.mxu0 %v1892
    %2118 = vmatpush1.bf16.msra.mxu0 %v1891
    %2119 = vmatprep.mubr.bf16.mxu0 %v1294
    %2120 = vmatmul.mubr.bf16.gmra.mrb[0].mxu0 %v1293
    %v2121 = vpop.f32.mrb[0].mxu0
    %v2122 = vadd.f32 %v1430, %v2121
    %v2123 = vpop.f32.mrb[0].mxu0
    %v2124 = vadd.f32 %v1434, %v2123
    %v2125 = vpop.f32.mrb[0].mxu0
    %v2126 = vadd.f32 %v1430, %v2125
    %v2127 = vpop.f32.mrb[0].mxu0
    %v2128 = vadd.f32 %v1434, %v2127
    %2129 = vdwg.mxu0
    %2130 = vmatprep.subr.bf16.mxu0 %v1896
    %2131 = vmatpush1.bf16.msra.mxu0 %v1895
    %2132 = vmatprep.subr.bf16.mxu0 %v1900
    %2133 = vmatpush1.bf16.msra.mxu0 %v1899
    %2134 = vmatprep.subr.bf16.mxu0 %v1904
    %2135 = vmatpush1.bf16.msra.mxu0 %v1903
    %2136 = vmatprep.subr.bf16.mxu0 %v1908
    %2137 = vmatpush1.bf16.msra.mxu0 %v1907
    %2138 = vmatprep.subr.bf16.mxu0 %v1912
    %2139 = vmatpush1.bf16.msra.mxu0 %v1911
    %2140 = vmatprep.subr.bf16.mxu0 %v1916
    %2141 = vmatpush1.bf16.msra.mxu0 %v1915
    %2142 = vmatprep.subr.bf16.mxu0 %v1920
    %2143 = vmatpush1.bf16.msra.mxu0 %v1919
    %2144 = vmatprep.subr.bf16.mxu0 %v1924
    %2145 = vmatpush1.bf16.msra.mxu0 %v1923
    %2146 = vmatprep.subr.bf16.mxu0 %v1928
    %2147 = vmatpush1.bf16.msra.mxu0 %v1927
    %2148 = vmatprep.subr.bf16.mxu0 %v1932
    %2149 = vmatpush1.bf16.msra.mxu0 %v1931
    %2150 = vmatprep.subr.bf16.mxu0 %v1936
    %2151 = vmatpush1.bf16.msra.mxu0 %v1935
    %2152 = vmatprep.subr.bf16.mxu0 %v1940
    %2153 = vmatpush1.bf16.msra.mxu0 %v1939
    %2154 = vmatprep.subr.bf16.mxu0 %v1944
    %2155 = vmatpush1.bf16.msra.mxu0 %v1943
    %2156 = vmatprep.subr.bf16.mxu0 %v1948
    %2157 = vmatpush1.bf16.msra.mxu0 %v1947
    %2158 = vmatprep.subr.bf16.mxu0 %v1952
    %2159 = vmatpush1.bf16.msra.mxu0 %v1951
    %2160 = vmatprep.subr.bf16.mxu0 %v1956
    %2161 = vmatpush1.bf16.msra.mxu0 %v1955
    %2162 = vmatprep.mubr.bf16.mxu0 %v1296
    %2163 = vmatmul.mubr.bf16.gmra.mrb[0].mxu0 %v1295
    %v2164 = vpop.f32.mrb[0].mxu0
    %v2165 = vadd.f32 %v2122, %v2164
    %v2166 = vpop.f32.mrb[0].mxu0
    %v2167 = vadd.f32 %v2124, %v2166
    %v2168 = vpop.f32.mrb[0].mxu0
    %v2169 = vadd.f32 %v2126, %v2168
    %v2170 = vpop.f32.mrb[0].mxu0
    %v2171 = vadd.f32 %v2128, %v2170
    %2172 = vdwg.mxu0
    %2173 = vmatprep.subr.bf16.mxu0 %v1834
    %2174 = vmatpush1.bf16.msra.mxu0 %v1833
    %2175 = vmatprep.subr.bf16.mxu0 %v1838
    %2176 = vmatpush1.bf16.msra.mxu0 %v1837
    %2177 = vmatprep.subr.bf16.mxu0 %v1842
    %2178 = vmatpush1.bf16.msra.mxu0 %v1841
    %2179 = vmatprep.subr.bf16.mxu0 %v1846
    %2180 = vmatpush1.bf16.msra.mxu0 %v1845
    %2181 = vmatprep.subr.bf16.mxu0 %v1850
    %2182 = vmatpush1.bf16.msra.mxu0 %v1849
    %2183 = vmatprep.subr.bf16.mxu0 %v1854
    %2184 = vmatpush1.bf16.msra.mxu0 %v1853
    %2185 = vmatprep.subr.bf16.mxu0 %v1858
    %2186 = vmatpush1.bf16.msra.mxu0 %v1857
    %2187 = vmatprep.subr.bf16.mxu0 %v1862
    %2188 = vmatpush1.bf16.msra.mxu0 %v1861
    %2189 = vmatprep.subr.bf16.mxu0 %v1866
    %2190 = vmatpush1.bf16.msra.mxu0 %v1865
    %2191 = vmatprep.subr.bf16.mxu0 %v1870
    %2192 = vmatpush1.bf16.msra.mxu0 %v1869
    %2193 = vmatprep.subr.bf16.mxu0 %v1874
    %2194 = vmatpush1.bf16.msra.mxu0 %v1873
    %2195 = vmatprep.subr.bf16.mxu0 %v1878
    %2196 = vmatpush1.bf16.msra.mxu0 %v1877
    %2197 = vmatprep.subr.bf16.mxu0 %v1882
    %2198 = vmatpush1.bf16.msra.mxu0 %v1881
    %2199 = vmatprep.subr.bf16.mxu0 %v1886
    %2200 = vmatpush1.bf16.msra.mxu0 %v1885
    %2201 = vmatprep.subr.bf16.mxu0 %v1890
    %2202 = vmatpush1.bf16.msra.mxu0 %v1889
    %2203 = vmatprep.subr.bf16.mxu0 %v1894
    %2204 = vmatpush1.bf16.msra.mxu0 %v1893
    %2205 = vmatprep.mubr.bf16.mxu0 %v1294
    %2206 = vmatmul.mubr.bf16.gmra.mrb[0].mxu0 %v1293
    %v2207 = vpop.f32.mrb[0].mxu0
    %v2208 = vadd.f32 %v1438, %v2207
    %v2209 = vpop.f32.mrb[0].mxu0
    %v2210 = vadd.f32 %v1442, %v2209
    %v2211 = vpop.f32.mrb[0].mxu0
    %v2212 = vadd.f32 %v1438, %v2211
    %v2213 = vpop.f32.mrb[0].mxu0
    %v2214 = vadd.f32 %v1442, %v2213
    %2215 = vdwg.mxu0
    %2216 = vmatprep.subr.bf16.mxu0 %v1898
    %2217 = vmatpush1.bf16.msra.mxu0 %v1897
    %2218 = vmatprep.subr.bf16.mxu0 %v1902
    %2219 = vmatpush1.bf16.msra.mxu0 %v1901
    %2220 = vmatprep.subr.bf16.mxu0 %v1906
    %2221 = vmatpush1.bf16.msra.mxu0 %v1905
    %2222 = vmatprep.subr.bf16.mxu0 %v1910
    %2223 = vmatpush1.bf16.msra.mxu0 %v1909
    %2224 = vmatprep.subr.bf16.mxu0 %v1914
    %2225 = vmatpush1.bf16.msra.mxu0 %v1913
    %2226 = vmatprep.subr.bf16.mxu0 %v1918
    %2227 = vmatpush1.bf16.msra.mxu0 %v1917
    %2228 = vmatprep.subr.bf16.mxu0 %v1922
    %2229 = vmatpush1.bf16.msra.mxu0 %v1921
    %2230 = vmatprep.subr.bf16.mxu0 %v1926
    %2231 = vmatpush1.bf16.msra.mxu0 %v1925
    %2232 = vmatprep.subr.bf16.mxu0 %v1930
    %2233 = vmatpush1.bf16.msra.mxu0 %v1929
    %2234 = vmatprep.subr.bf16.mxu0 %v1934
    %2235 = vmatpush1.bf16.msra.mxu0 %v1933
    %2236 = vmatprep.subr.bf16.mxu0 %v1938
    %2237 = vmatpush1.bf16.msra.mxu0 %v1937
    %2238 = vmatprep.subr.bf16.mxu0 %v1942
    %2239 = vmatpush1.bf16.msra.mxu0 %v1941
    %2240 = vmatprep.subr.bf16.mxu0 %v1946
    %2241 = vmatpush1.bf16.msra.mxu0 %v1945
    %2242 = vmatprep.subr.bf16.mxu0 %v1950
    %2243 = vmatpush1.bf16.msra.mxu0 %v1949
    %2244 = vmatprep.subr.bf16.mxu0 %v1954
    %2245 = vmatpush1.bf16.msra.mxu0 %v1953
    %2246 = vmatprep.subr.bf16.mxu0 %v1958
    %2247 = vmatpush1.bf16.msra.mxu0 %v1957
    %2248 = vmatprep.mubr.bf16.mxu0 %v1296
    %2249 = vmatmul.mubr.bf16.gmra.mrb[0].mxu0 %v1295
    %v2250 = vpop.f32.mrb[0].mxu0
    %v2251 = vadd.f32 %v2208, %v2250
    %v2252 = vpop.f32.mrb[0].mxu0
    %v2253 = vadd.f32 %v2210, %v2252
    %v2254 = vpop.f32.mrb[0].mxu0
    %v2255 = vadd.f32 %v2212, %v2254
    %v2256 = vpop.f32.mrb[0].mxu0
    %v2257 = vadd.f32 %v2214, %v2256
    %2258 = vdwg.mxu0
    %v2259 = vmax.f32 %v2165, 0.0
    %v2260 = vmax.f32 %v2167, 0.0
    %v2261 = vmax.f32 %v2251, 0.0
    %v2262 = vmax.f32 %v2253, 0.0
    %v2263 = vmax.f32 %v2169, 0.0
    %v2264 = vmax.f32 %v2171, 0.0
    %v2265 = vmax.f32 %v2255, 0.0
    %v2266 = vmax.f32 %v2257, 0.0
    %v2267 = vpack.c.bf16 %v2263, %v2259
    %v2268 = vpack.c.bf16 %v2264, %v2260
    %v2269 = vpack.c.bf16 %v2265, %v2261
    %v2270 = vpack.c.bf16 %v2266, %v2262
    %v2271 = vld [vmem:[#allocation8] sm:$0xff]
    %v2272 = vld [vmem:[#allocation8 + $0x8] sm:$0xff]
    %v2273 = vld [vmem:[#allocation8 + $0x10] sm:$0xff]
    %v2274 = vld [vmem:[#allocation8 + $0x18] sm:$0xff]
    %v2275 = vld [vmem:[#allocation8 + $0x20] sm:$0xff]
    %v2276 = vld [vmem:[#allocation8 + $0x28] sm:$0xff]
    %v2277 = vld [vmem:[#allocation8 + $0x30] sm:$0xff]
    %v2278 = vld [vmem:[#allocation8 + $0x38] sm:$0xff]
    %v2279 = vld [vmem:[#allocation8 + $0x40] sm:$0xff]
    %v2280 = vld [vmem:[#allocation8 + $0x48] sm:$0xff]
    %v2281 = vld [vmem:[#allocation8 + $0x50] sm:$0xff]
    %v2282 = vld [vmem:[#allocation8 + $0x58] sm:$0xff]
    %v2283 = vld [vmem:[#allocation8 + $0x60] sm:$0xff]
    %v2284 = vld [vmem:[#allocation8 + $0x68] sm:$0xff]
    %v2285 = vld [vmem:[#allocation8 + $0x70] sm:$0xff]
    %v2286 = vld [vmem:[#allocation8 + $0x78] sm:$0xff]
    %v2287 = vld [vmem:[#allocation8 + $0x80] sm:$0xff]
    %v2288 = vld [vmem:[#allocation8 + $0x88] sm:$0xff]
    %v2289 = vld [vmem:[#allocation8 + $0x90] sm:$0xff]
    %v2290 = vld [vmem:[#allocation8 + $0x98] sm:$0xff]
    %v2291 = vld [vmem:[#allocation8 + $0xa0] sm:$0xff]
    %v2292 = vld [vmem:[#allocation8 + $0xa8] sm:$0xff]
    %v2293 = vld [vmem:[#allocation8 + $0xb0] sm:$0xff]
    %v2294 = vld [vmem:[#allocation8 + $0xb8] sm:$0xff]
    %v2295 = vld [vmem:[#allocation8 + $0xc0] sm:$0xff]
    %v2296 = vld [vmem:[#allocation8 + $0xc8] sm:$0xff]
    %v2297 = vld [vmem:[#allocation8 + $0xd0] sm:$0xff]
    %v2298 = vld [vmem:[#allocation8 + $0xd8] sm:$0xff]
    %v2299 = vld [vmem:[#allocation8 + $0xe0] sm:$0xff]
    %v2300 = vld [vmem:[#allocation8 + $0xe8] sm:$0xff]
    %v2301 = vld [vmem:[#allocation8 + $0xf0] sm:$0xff]
    %v2302 = vld [vmem:[#allocation8 + $0xf8] sm:$0xff]
    %v2303 = vld [vmem:[#allocation8 + $0x100] sm:$0xff]
    %v2304 = vld [vmem:[#allocation8 + $0x108] sm:$0xff]
    %v2305 = vld [vmem:[#allocation8 + $0x110] sm:$0xff]
    %v2306 = vld [vmem:[#allocation8 + $0x118] sm:$0xff]
    %v2307 = vld [vmem:[#allocation8 + $0x120] sm:$0xff]
    %v2308 = vld [vmem:[#allocation8 + $0x128] sm:$0xff]
    %v2309 = vld [vmem:[#allocation8 + $0x130] sm:$0xff]
    %v2310 = vld [vmem:[#allocation8 + $0x138] sm:$0xff]
    %v2311 = vld [vmem:[#allocation8 + $0x140] sm:$0xff]
    %v2312 = vld [vmem:[#allocation8 + $0x148] sm:$0xff]
    %v2313 = vld [vmem:[#allocation8 + $0x150] sm:$0xff]
    %v2314 = vld [vmem:[#allocation8 + $0x158] sm:$0xff]
    %v2315 = vld [vmem:[#allocation8 + $0x160] sm:$0xff]
    %v2316 = vld [vmem:[#allocation8 + $0x168] sm:$0xff]
    %v2317 = vld [vmem:[#allocation8 + $0x170] sm:$0xff]
    %v2318 = vld [vmem:[#allocation8 + $0x178] sm:$0xff]
    %v2319 = vld [vmem:[#allocation8 + $0x180] sm:$0xff]
    %v2320 = vld [vmem:[#allocation8 + $0x188] sm:$0xff]
    %v2321 = vld [vmem:[#allocation8 + $0x190] sm:$0xff]
    %v2322 = vld [vmem:[#allocation8 + $0x198] sm:$0xff]
    %v2323 = vld [vmem:[#allocation8 + $0x1a0] sm:$0xff]
    %v2324 = vld [vmem:[#allocation8 + $0x1a8] sm:$0xff]
    %v2325 = vld [vmem:[#allocation8 + $0x1b0] sm:$0xff]
    %v2326 = vld [vmem:[#allocation8 + $0x1b8] sm:$0xff]
    %v2327 = vld [vmem:[#allocation8 + $0x1c0] sm:$0xff]
    %v2328 = vld [vmem:[#allocation8 + $0x1c8] sm:$0xff]
    %v2329 = vld [vmem:[#allocation8 + $0x1d0] sm:$0xff]
    %v2330 = vld [vmem:[#allocation8 + $0x1d8] sm:$0xff]
    %v2331 = vld [vmem:[#allocation8 + $0x1e0] sm:$0xff]
    %v2332 = vld [vmem:[#allocation8 + $0x1e8] sm:$0xff]
    %v2333 = vld [vmem:[#allocation8 + $0x1f0] sm:$0xff]
    %v2334 = vld [vmem:[#allocation8 + $0x1f8] sm:$0xff]
    %v2335 = vld [vmem:[#allocation8 + $0x200] sm:$0xff]
    %v2336 = vld [vmem:[#allocation8 + $0x208] sm:$0xff]
    %v2337 = vld [vmem:[#allocation8 + $0x210] sm:$0xff]
    %v2338 = vld [vmem:[#allocation8 + $0x218] sm:$0xff]
    %v2339 = vld [vmem:[#allocation8 + $0x220] sm:$0xff]
    %v2340 = vld [vmem:[#allocation8 + $0x228] sm:$0xff]
    %v2341 = vld [vmem:[#allocation8 + $0x230] sm:$0xff]
    %v2342 = vld [vmem:[#allocation8 + $0x238] sm:$0xff]
    %v2343 = vld [vmem:[#allocation8 + $0x240] sm:$0xff]
    %v2344 = vld [vmem:[#allocation8 + $0x248] sm:$0xff]
    %v2345 = vld [vmem:[#allocation8 + $0x250] sm:$0xff]
    %v2346 = vld [vmem:[#allocation8 + $0x258] sm:$0xff]
    %v2347 = vld [vmem:[#allocation8 + $0x260] sm:$0xff]
    %v2348 = vld [vmem:[#allocation8 + $0x268] sm:$0xff]
    %v2349 = vld [vmem:[#allocation8 + $0x270] sm:$0xff]
    %v2350 = vld [vmem:[#allocation8 + $0x278] sm:$0xff]
    %v2351 = vld [vmem:[#allocation8 + $0x280] sm:$0xff]
    %v2352 = vld [vmem:[#allocation8 + $0x288] sm:$0xff]
    %v2353 = vld [vmem:[#allocation8 + $0x290] sm:$0xff]
    %v2354 = vld [vmem:[#allocation8 + $0x298] sm:$0xff]
    %v2355 = vld [vmem:[#allocation8 + $0x2a0] sm:$0xff]
    %v2356 = vld [vmem:[#allocation8 + $0x2a8] sm:$0xff]
    %v2357 = vld [vmem:[#allocation8 + $0x2b0] sm:$0xff]
    %v2358 = vld [vmem:[#allocation8 + $0x2b8] sm:$0xff]
    %v2359 = vld [vmem:[#allocation8 + $0x2c0] sm:$0xff]
    %v2360 = vld [vmem:[#allocation8 + $0x2c8] sm:$0xff]
    %v2361 = vld [vmem:[#allocation8 + $0x2d0] sm:$0xff]
    %v2362 = vld [vmem:[#allocation8 + $0x2d8] sm:$0xff]
    %v2363 = vld [vmem:[#allocation8 + $0x2e0] sm:$0xff]
    %v2364 = vld [vmem:[#allocation8 + $0x2e8] sm:$0xff]
    %v2365 = vld [vmem:[#allocation8 + $0x2f0] sm:$0xff]
    %v2366 = vld [vmem:[#allocation8 + $0x2f8] sm:$0xff]
    %v2367 = vld [vmem:[#allocation8 + $0x300] sm:$0xff]
    %v2368 = vld [vmem:[#allocation8 + $0x308] sm:$0xff]
    %v2369 = vld [vmem:[#allocation8 + $0x310] sm:$0xff]
    %v2370 = vld [vmem:[#allocation8 + $0x318] sm:$0xff]
    %v2371 = vld [vmem:[#allocation8 + $0x320] sm:$0xff]
    %v2372 = vld [vmem:[#allocation8 + $0x328] sm:$0xff]
    %v2373 = vld [vmem:[#allocation8 + $0x330] sm:$0xff]
    %v2374 = vld [vmem:[#allocation8 + $0x338] sm:$0xff]
    %v2375 = vld [vmem:[#allocation8 + $0x340] sm:$0xff]
    %v2376 = vld [vmem:[#allocation8 + $0x348] sm:$0xff]
    %v2377 = vld [vmem:[#allocation8 + $0x350] sm:$0xff]
    %v2378 = vld [vmem:[#allocation8 + $0x358] sm:$0xff]
    %v2379 = vld [vmem:[#allocation8 + $0x360] sm:$0xff]
    %v2380 = vld [vmem:[#allocation8 + $0x368] sm:$0xff]
    %v2381 = vld [vmem:[#allocation8 + $0x370] sm:$0xff]
    %v2382 = vld [vmem:[#allocation8 + $0x378] sm:$0xff]
    %v2383 = vld [vmem:[#allocation8 + $0x380] sm:$0xff]
    %v2384 = vld [vmem:[#allocation8 + $0x388] sm:$0xff]
    %v2385 = vld [vmem:[#allocation8 + $0x390] sm:$0xff]
    %v2386 = vld [vmem:[#allocation8 + $0x398] sm:$0xff]
    %v2387 = vld [vmem:[#allocation8 + $0x3a0] sm:$0xff]
    %v2388 = vld [vmem:[#allocation8 + $0x3a8] sm:$0xff]
    %v2389 = vld [vmem:[#allocation8 + $0x3b0] sm:$0xff]
    %v2390 = vld [vmem:[#allocation8 + $0x3b8] sm:$0xff]
    %v2391 = vld [vmem:[#allocation8 + $0x3c0] sm:$0xff]
    %v2392 = vld [vmem:[#allocation8 + $0x3c8] sm:$0xff]
    %v2393 = vld [vmem:[#allocation8 + $0x3d0] sm:$0xff]
    %v2394 = vld [vmem:[#allocation8 + $0x3d8] sm:$0xff]
    %v2395 = vld [vmem:[#allocation8 + $0x3e0] sm:$0xff]
    %v2396 = vld [vmem:[#allocation8 + $0x3e8] sm:$0xff]
    %v2397 = vld [vmem:[#allocation8 + $0x3f0] sm:$0xff]
    %v2398 = vld [vmem:[#allocation8 + $0x3f8] sm:$0xff]
    %v2399 = vld [vmem:[%s8] sm:$0xf]
    %v2401 = vlaneseq
    %v2402 = vshrl.u32 %v2401, 7
    %v2403 = vsub.s32 0, %v2402
    %v2404 = vrot.slane %v2399, %v2403
    %v2405 = vlaneseq
    %v2406 = vshrl.u32 %v2405, 7
    %v2407 = vsub.s32 1, %v2406
    %v2408 = vrot.slane %v2399, %v2407
    %v2409 = vlaneseq
    %v2410 = vshrl.u32 %v2409, 7
    %v2411 = vsub.s32 2, %v2410
    %v2412 = vrot.slane %v2399, %v2411
    %v2413 = vlaneseq
    %v2414 = vshrl.u32 %v2413, 7
    %v2415 = vsub.s32 3, %v2414
    %v2416 = vrot.slane %v2399, %v2415
    %v2549 = vunpack.c.l.b16 %v2271
    %v2550 = vunpack.c.h.b16 %v2271
    %v2551 = vunpack.c.l.b16 %v2272
    %v2552 = vunpack.c.h.b16 %v2272
    %v2553 = vunpack.c.l.b16 %v2273
    %v2554 = vunpack.c.h.b16 %v2273
    %v2555 = vunpack.c.l.b16 %v2274
    %v2556 = vunpack.c.h.b16 %v2274
    %v2557 = vunpack.c.l.b16 %v2275
    %v2558 = vunpack.c.h.b16 %v2275
    %v2559 = vunpack.c.l.b16 %v2276
    %v2560 = vunpack.c.h.b16 %v2276
    %v2561 = vunpack.c.l.b16 %v2277
    %v2562 = vunpack.c.h.b16 %v2277
    %v2563 = vunpack.c.l.b16 %v2278
    %v2564 = vunpack.c.h.b16 %v2278
    %v2565 = vunpack.c.l.b16 %v2279
    %v2566 = vunpack.c.h.b16 %v2279
    %v2567 = vunpack.c.l.b16 %v2280
    %v2568 = vunpack.c.h.b16 %v2280
    %v2569 = vunpack.c.l.b16 %v2281
    %v2570 = vunpack.c.h.b16 %v2281
    %v2571 = vunpack.c.l.b16 %v2282
    %v2572 = vunpack.c.h.b16 %v2282
    %v2573 = vunpack.c.l.b16 %v2283
    %v2574 = vunpack.c.h.b16 %v2283
    %v2575 = vunpack.c.l.b16 %v2284
    %v2576 = vunpack.c.h.b16 %v2284
    %v2577 = vunpack.c.l.b16 %v2285
    %v2578 = vunpack.c.h.b16 %v2285
    %v2579 = vunpack.c.l.b16 %v2286
    %v2580 = vunpack.c.h.b16 %v2286
    %v2581 = vunpack.c.l.b16 %v2287
    %v2582 = vunpack.c.h.b16 %v2287
    %v2583 = vunpack.c.l.b16 %v2288
    %v2584 = vunpack.c.h.b16 %v2288
    %v2585 = vunpack.c.l.b16 %v2289
    %v2586 = vunpack.c.h.b16 %v2289
    %v2587 = vunpack.c.l.b16 %v2290
    %v2588 = vunpack.c.h.b16 %v2290
    %v2589 = vunpack.c.l.b16 %v2291
    %v2590 = vunpack.c.h.b16 %v2291
    %v2591 = vunpack.c.l.b16 %v2292
    %v2592 = vunpack.c.h.b16 %v2292
    %v2593 = vunpack.c.l.b16 %v2293
    %v2594 = vunpack.c.h.b16 %v2293
    %v2595 = vunpack.c.l.b16 %v2294
    %v2596 = vunpack.c.h.b16 %v2294
    %v2597 = vunpack.c.l.b16 %v2295
    %v2598 = vunpack.c.h.b16 %v2295
    %v2599 = vunpack.c.l.b16 %v2296
    %v2600 = vunpack.c.h.b16 %v2296
    %v2601 = vunpack.c.l.b16 %v2297
    %v2602 = vunpack.c.h.b16 %v2297
    %v2603 = vunpack.c.l.b16 %v2298
    %v2604 = vunpack.c.h.b16 %v2298
    %v2605 = vunpack.c.l.b16 %v2299
    %v2606 = vunpack.c.h.b16 %v2299
    %v2607 = vunpack.c.l.b16 %v2300
    %v2608 = vunpack.c.h.b16 %v2300
    %v2609 = vunpack.c.l.b16 %v2301
    %v2610 = vunpack.c.h.b16 %v2301
    %v2611 = vunpack.c.l.b16 %v2302
    %v2612 = vunpack.c.h.b16 %v2302
    %v2613 = vunpack.c.l.b16 %v2303
    %v2614 = vunpack.c.h.b16 %v2303
    %v2615 = vunpack.c.l.b16 %v2304
    %v2616 = vunpack.c.h.b16 %v2304
    %v2617 = vunpack.c.l.b16 %v2305
    %v2618 = vunpack.c.h.b16 %v2305
    %v2619 = vunpack.c.l.b16 %v2306
    %v2620 = vunpack.c.h.b16 %v2306
    %v2621 = vunpack.c.l.b16 %v2307
    %v2622 = vunpack.c.h.b16 %v2307
    %v2623 = vunpack.c.l.b16 %v2308
    %v2624 = vunpack.c.h.b16 %v2308
    %v2625 = vunpack.c.l.b16 %v2309
    %v2626 = vunpack.c.h.b16 %v2309
    %v2627 = vunpack.c.l.b16 %v2310
    %v2628 = vunpack.c.h.b16 %v2310
    %v2629 = vunpack.c.l.b16 %v2311
    %v2630 = vunpack.c.h.b16 %v2311
    %v2631 = vunpack.c.l.b16 %v2312
    %v2632 = vunpack.c.h.b16 %v2312
    %v2633 = vunpack.c.l.b16 %v2313
    %v2634 = vunpack.c.h.b16 %v2313
    %v2635 = vunpack.c.l.b16 %v2314
    %v2636 = vunpack.c.h.b16 %v2314
    %v2637 = vunpack.c.l.b16 %v2315
    %v2638 = vunpack.c.h.b16 %v2315
    %v2639 = vunpack.c.l.b16 %v2316
    %v2640 = vunpack.c.h.b16 %v2316
    %v2641 = vunpack.c.l.b16 %v2317
    %v2642 = vunpack.c.h.b16 %v2317
    %v2643 = vunpack.c.l.b16 %v2318
    %v2644 = vunpack.c.h.b16 %v2318
    %v2645 = vunpack.c.l.b16 %v2319
    %v2646 = vunpack.c.h.b16 %v2319
    %v2647 = vunpack.c.l.b16 %v2320
    %v2648 = vunpack.c.h.b16 %v2320
    %v2649 = vunpack.c.l.b16 %v2321
    %v2650 = vunpack.c.h.b16 %v2321
    %v2651 = vunpack.c.l.b16 %v2322
    %v2652 = vunpack.c.h.b16 %v2322
    %v2653 = vunpack.c.l.b16 %v2323
    %v2654 = vunpack.c.h.b16 %v2323
    %v2655 = vunpack.c.l.b16 %v2324
    %v2656 = vunpack.c.h.b16 %v2324
    %v2657 = vunpack.c.l.b16 %v2325
    %v2658 = vunpack.c.h.b16 %v2325
    %v2659 = vunpack.c.l.b16 %v2326
    %v2660 = vunpack.c.h.b16 %v2326
    %v2661 = vunpack.c.l.b16 %v2327
    %v2662 = vunpack.c.h.b16 %v2327
    %v2663 = vunpack.c.l.b16 %v2328
    %v2664 = vunpack.c.h.b16 %v2328
    %v2665 = vunpack.c.l.b16 %v2329
    %v2666 = vunpack.c.h.b16 %v2329
    %v2667 = vunpack.c.l.b16 %v2330
    %v2668 = vunpack.c.h.b16 %v2330
    %v2669 = vunpack.c.l.b16 %v2331
    %v2670 = vunpack.c.h.b16 %v2331
    %v2671 = vunpack.c.l.b16 %v2332
    %v2672 = vunpack.c.h.b16 %v2332
    %v2673 = vunpack.c.l.b16 %v2333
    %v2674 = vunpack.c.h.b16 %v2333
    %v2675 = vunpack.c.l.b16 %v2334
    %v2676 = vunpack.c.h.b16 %v2334
    %v2677 = vunpack.c.l.b16 %v2335
    %v2678 = vunpack.c.h.b16 %v2335
    %v2679 = vunpack.c.l.b16 %v2336
    %v2680 = vunpack.c.h.b16 %v2336
    %v2681 = vunpack.c.l.b16 %v2337
    %v2682 = vunpack.c.h.b16 %v2337
    %v2683 = vunpack.c.l.b16 %v2338
    %v2684 = vunpack.c.h.b16 %v2338
    %v2685 = vunpack.c.l.b16 %v2339
    %v2686 = vunpack.c.h.b16 %v2339
    %v2687 = vunpack.c.l.b16 %v2340
    %v2688 = vunpack.c.h.b16 %v2340
    %v2689 = vunpack.c.l.b16 %v2341
    %v2690 = vunpack.c.h.b16 %v2341
    %v2691 = vunpack.c.l.b16 %v2342
    %v2692 = vunpack.c.h.b16 %v2342
    %v2693 = vunpack.c.l.b16 %v2343
    %v2694 = vunpack.c.h.b16 %v2343
    %v2695 = vunpack.c.l.b16 %v2344
    %v2696 = vunpack.c.h.b16 %v2344
    %v2697 = vunpack.c.l.b16 %v2345
    %v2698 = vunpack.c.h.b16 %v2345
    %v2699 = vunpack.c.l.b16 %v2346
    %v2700 = vunpack.c.h.b16 %v2346
    %v2701 = vunpack.c.l.b16 %v2347
    %v2702 = vunpack.c.h.b16 %v2347
    %v2703 = vunpack.c.l.b16 %v2348
    %v2704 = vunpack.c.h.b16 %v2348
    %v2705 = vunpack.c.l.b16 %v2349
    %v2706 = vunpack.c.h.b16 %v2349
    %v2707 = vunpack.c.l.b16 %v2350
    %v2708 = vunpack.c.h.b16 %v2350
    %v2709 = vunpack.c.l.b16 %v2351
    %v2710 = vunpack.c.h.b16 %v2351
    %v2711 = vunpack.c.l.b16 %v2352
    %v2712 = vunpack.c.h.b16 %v2352
    %v2713 = vunpack.c.l.b16 %v2353
    %v2714 = vunpack.c.h.b16 %v2353
    %v2715 = vunpack.c.l.b16 %v2354
    %v2716 = vunpack.c.h.b16 %v2354
    %v2717 = vunpack.c.l.b16 %v2355
    %v2718 = vunpack.c.h.b16 %v2355
    %v2719 = vunpack.c.l.b16 %v2356
    %v2720 = vunpack.c.h.b16 %v2356
    %v2721 = vunpack.c.l.b16 %v2357
    %v2722 = vunpack.c.h.b16 %v2357
    %v2723 = vunpack.c.l.b16 %v2358
    %v2724 = vunpack.c.h.b16 %v2358
    %v2725 = vunpack.c.l.b16 %v2359
    %v2726 = vunpack.c.h.b16 %v2359
    %v2727 = vunpack.c.l.b16 %v2360
    %v2728 = vunpack.c.h.b16 %v2360
    %v2729 = vunpack.c.l.b16 %v2361
    %v2730 = vunpack.c.h.b16 %v2361
    %v2731 = vunpack.c.l.b16 %v2362
    %v2732 = vunpack.c.h.b16 %v2362
    %v2733 = vunpack.c.l.b16 %v2363
    %v2734 = vunpack.c.h.b16 %v2363
    %v2735 = vunpack.c.l.b16 %v2364
    %v2736 = vunpack.c.h.b16 %v2364
    %v2737 = vunpack.c.l.b16 %v2365
    %v2738 = vunpack.c.h.b16 %v2365
    %v2739 = vunpack.c.l.b16 %v2366
    %v2740 = vunpack.c.h.b16 %v2366
    %v2741 = vunpack.c.l.b16 %v2367
    %v2742 = vunpack.c.h.b16 %v2367
    %v2743 = vunpack.c.l.b16 %v2368
    %v2744 = vunpack.c.h.b16 %v2368
    %v2745 = vunpack.c.l.b16 %v2369
    %v2746 = vunpack.c.h.b16 %v2369
    %v2747 = vunpack.c.l.b16 %v2370
    %v2748 = vunpack.c.h.b16 %v2370
    %v2749 = vunpack.c.l.b16 %v2371
    %v2750 = vunpack.c.h.b16 %v2371
    %v2751 = vunpack.c.l.b16 %v2372
    %v2752 = vunpack.c.h.b16 %v2372
    %v2753 = vunpack.c.l.b16 %v2373
    %v2754 = vunpack.c.h.b16 %v2373
    %v2755 = vunpack.c.l.b16 %v2374
    %v2756 = vunpack.c.h.b16 %v2374
    %v2757 = vunpack.c.l.b16 %v2375
    %v2758 = vunpack.c.h.b16 %v2375
    %v2759 = vunpack.c.l.b16 %v2376
    %v2760 = vunpack.c.h.b16 %v2376
    %v2761 = vunpack.c.l.b16 %v2377
    %v2762 = vunpack.c.h.b16 %v2377
    %v2763 = vunpack.c.l.b16 %v2378
    %v2764 = vunpack.c.h.b16 %v2378
    %v2765 = vunpack.c.l.b16 %v2379
    %v2766 = vunpack.c.h.b16 %v2379
    %v2767 = vunpack.c.l.b16 %v2380
    %v2768 = vunpack.c.h.b16 %v2380
    %v2769 = vunpack.c.l.b16 %v2381
    %v2770 = vunpack.c.h.b16 %v2381
    %v2771 = vunpack.c.l.b16 %v2382
    %v2772 = vunpack.c.h.b16 %v2382
    %v2773 = vunpack.c.l.b16 %v2383
    %v2774 = vunpack.c.h.b16 %v2383
    %v2775 = vunpack.c.l.b16 %v2384
    %v2776 = vunpack.c.h.b16 %v2384
    %v2777 = vunpack.c.l.b16 %v2385
    %v2778 = vunpack.c.h.b16 %v2385
    %v2779 = vunpack.c.l.b16 %v2386
    %v2780 = vunpack.c.h.b16 %v2386
    %v2781 = vunpack.c.l.b16 %v2387
    %v2782 = vunpack.c.h.b16 %v2387
    %v2783 = vunpack.c.l.b16 %v2388
    %v2784 = vunpack.c.h.b16 %v2388
    %v2785 = vunpack.c.l.b16 %v2389
    %v2786 = vunpack.c.h.b16 %v2389
    %v2787 = vunpack.c.l.b16 %v2390
    %v2788 = vunpack.c.h.b16 %v2390
    %v2789 = vunpack.c.l.b16 %v2391
    %v2790 = vunpack.c.h.b16 %v2391
    %v2791 = vunpack.c.l.b16 %v2392
    %v2792 = vunpack.c.h.b16 %v2392
    %v2793 = vunpack.c.l.b16 %v2393
    %v2794 = vunpack.c.h.b16 %v2393
    %v2795 = vunpack.c.l.b16 %v2394
    %v2796 = vunpack.c.h.b16 %v2394
    %v2797 = vunpack.c.l.b16 %v2395
    %v2798 = vunpack.c.h.b16 %v2395
    %v2799 = vunpack.c.l.b16 %v2396
    %v2800 = vunpack.c.h.b16 %v2396
    %v2801 = vunpack.c.l.b16 %v2397
    %v2802 = vunpack.c.h.b16 %v2397
    %v2803 = vunpack.c.l.b16 %v2398
    %v2804 = vunpack.c.h.b16 %v2398
    %v2805 = vpack.c.b16 %v2553, %v2549
    %v2806 = vpack.c.b16 %v2554, %v2550
    %v2807 = vpack.c.b16 %v2555, %v2551
    %v2808 = vpack.c.b16 %v2556, %v2552
    %v2809 = vpack.c.b16 %v2561, %v2557
    %v2810 = vpack.c.b16 %v2562, %v2558
    %v2811 = vpack.c.b16 %v2563, %v2559
    %v2812 = vpack.c.b16 %v2564, %v2560
    %v2813 = vpack.c.b16 %v2569, %v2565
    %v2814 = vpack.c.b16 %v2570, %v2566
    %v2815 = vpack.c.b16 %v2571, %v2567
    %v2816 = vpack.c.b16 %v2572, %v2568
    %v2817 = vpack.c.b16 %v2577, %v2573
    %v2818 = vpack.c.b16 %v2578, %v2574
    %v2819 = vpack.c.b16 %v2579, %v2575
    %v2820 = vpack.c.b16 %v2580, %v2576
    %v2821 = vpack.c.b16 %v2585, %v2581
    %v2822 = vpack.c.b16 %v2586, %v2582
    %v2823 = vpack.c.b16 %v2587, %v2583
    %v2824 = vpack.c.b16 %v2588, %v2584
    %v2825 = vpack.c.b16 %v2593, %v2589
    %v2826 = vpack.c.b16 %v2594, %v2590
    %v2827 = vpack.c.b16 %v2595, %v2591
    %v2828 = vpack.c.b16 %v2596, %v2592
    %v2829 = vpack.c.b16 %v2601, %v2597
    %v2830 = vpack.c.b16 %v2602, %v2598
    %v2831 = vpack.c.b16 %v2603, %v2599
    %v2832 = vpack.c.b16 %v2604, %v2600
    %v2833 = vpack.c.b16 %v2609, %v2605
    %v2834 = vpack.c.b16 %v2610, %v2606
    %v2835 = vpack.c.b16 %v2611, %v2607
    %v2836 = vpack.c.b16 %v2612, %v2608
    %v2837 = vpack.c.b16 %v2617, %v2613
    %v2838 = vpack.c.b16 %v2618, %v2614
    %v2839 = vpack.c.b16 %v2619, %v2615
    %v2840 = vpack.c.b16 %v2620, %v2616
    %v2841 = vpack.c.b16 %v2625, %v2621
    %v2842 = vpack.c.b16 %v2626, %v2622
    %v2843 = vpack.c.b16 %v2627, %v2623
    %v2844 = vpack.c.b16 %v2628, %v2624
    %v2845 = vpack.c.b16 %v2633, %v2629
    %v2846 = vpack.c.b16 %v2634, %v2630
    %v2847 = vpack.c.b16 %v2635, %v2631
    %v2848 = vpack.c.b16 %v2636, %v2632
    %v2849 = vpack.c.b16 %v2641, %v2637
    %v2850 = vpack.c.b16 %v2642, %v2638
    %v2851 = vpack.c.b16 %v2643, %v2639
    %v2852 = vpack.c.b16 %v2644, %v2640
    %v2853 = vpack.c.b16 %v2649, %v2645
    %v2854 = vpack.c.b16 %v2650, %v2646
    %v2855 = vpack.c.b16 %v2651, %v2647
    %v2856 = vpack.c.b16 %v2652, %v2648
    %v2857 = vpack.c.b16 %v2657, %v2653
    %v2858 = vpack.c.b16 %v2658, %v2654
    %v2859 = vpack.c.b16 %v2659, %v2655
    %v2860 = vpack.c.b16 %v2660, %v2656
    %v2861 = vpack.c.b16 %v2665, %v2661
    %v2862 = vpack.c.b16 %v2666, %v2662
    %v2863 = vpack.c.b16 %v2667, %v2663
    %v2864 = vpack.c.b16 %v2668, %v2664
    %v2865 = vpack.c.b16 %v2673, %v2669
    %v2866 = vpack.c.b16 %v2674, %v2670
    %v2867 = vpack.c.b16 %v2675, %v2671
    %v2868 = vpack.c.b16 %v2676, %v2672
    %v2869 = vpack.c.b16 %v2681, %v2677
    %v2870 = vpack.c.b16 %v2682, %v2678
    %v2871 = vpack.c.b16 %v2683, %v2679
    %v2872 = vpack.c.b16 %v2684, %v2680
    %v2873 = vpack.c.b16 %v2689, %v2685
    %v2874 = vpack.c.b16 %v2690, %v2686
    %v2875 = vpack.c.b16 %v2691, %v2687
    %v2876 = vpack.c.b16 %v2692, %v2688
    %v2877 = vpack.c.b16 %v2697, %v2693
    %v2878 = vpack.c.b16 %v2698, %v2694
    %v2879 = vpack.c.b16 %v2699, %v2695
    %v2880 = vpack.c.b16 %v2700, %v2696
    %v2881 = vpack.c.b16 %v2705, %v2701
    %v2882 = vpack.c.b16 %v2706, %v2702
    %v2883 = vpack.c.b16 %v2707, %v2703
    %v2884 = vpack.c.b16 %v2708, %v2704
    %v2885 = vpack.c.b16 %v2713, %v2709
    %v2886 = vpack.c.b16 %v2714, %v2710
    %v2887 = vpack.c.b16 %v2715, %v2711
    %v2888 = vpack.c.b16 %v2716, %v2712
    %v2889 = vpack.c.b16 %v2721, %v2717
    %v2890 = vpack.c.b16 %v2722, %v2718
    %v2891 = vpack.c.b16 %v2723, %v2719
    %v2892 = vpack.c.b16 %v2724, %v2720
    %v2893 = vpack.c.b16 %v2729, %v2725
    %v2894 = vpack.c.b16 %v2730, %v2726
    %v2895 = vpack.c.b16 %v2731, %v2727
    %v2896 = vpack.c.b16 %v2732, %v2728
    %v2897 = vpack.c.b16 %v2737, %v2733
    %v2898 = vpack.c.b16 %v2738, %v2734
    %v2899 = vpack.c.b16 %v2739, %v2735
    %v2900 = vpack.c.b16 %v2740, %v2736
    %v2901 = vpack.c.b16 %v2745, %v2741
    %v2902 = vpack.c.b16 %v2746, %v2742
    %v2903 = vpack.c.b16 %v2747, %v2743
    %v2904 = vpack.c.b16 %v2748, %v2744
    %v2905 = vpack.c.b16 %v2753, %v2749
    %v2906 = vpack.c.b16 %v2754, %v2750
    %v2907 = vpack.c.b16 %v2755, %v2751
    %v2908 = vpack.c.b16 %v2756, %v2752
    %v2909 = vpack.c.b16 %v2761, %v2757
    %v2910 = vpack.c.b16 %v2762, %v2758
    %v2911 = vpack.c.b16 %v2763, %v2759
    %v2912 = vpack.c.b16 %v2764, %v2760
    %v2913 = vpack.c.b16 %v2769, %v2765
    %v2914 = vpack.c.b16 %v2770, %v2766
    %v2915 = vpack.c.b16 %v2771, %v2767
    %v2916 = vpack.c.b16 %v2772, %v2768
    %v2917 = vpack.c.b16 %v2777, %v2773
    %v2918 = vpack.c.b16 %v2778, %v2774
    %v2919 = vpack.c.b16 %v2779, %v2775
    %v2920 = vpack.c.b16 %v2780, %v2776
    %v2921 = vpack.c.b16 %v2785, %v2781
    %v2922 = vpack.c.b16 %v2786, %v2782
    %v2923 = vpack.c.b16 %v2787, %v2783
    %v2924 = vpack.c.b16 %v2788, %v2784
    %v2925 = vpack.c.b16 %v2793, %v2789
    %v2926 = vpack.c.b16 %v2794, %v2790
    %v2927 = vpack.c.b16 %v2795, %v2791
    %v2928 = vpack.c.b16 %v2796, %v2792
    %v2929 = vpack.c.b16 %v2801, %v2797
    %v2930 = vpack.c.b16 %v2802, %v2798
    %v2931 = vpack.c.b16 %v2803, %v2799
    %v2932 = vpack.c.b16 %v2804, %v2800
    %3061 = vmatprep.subr.bf16.mxu0 %v2806
    %3062 = vmatpush1.bf16.msra.mxu0 %v2805
    %3063 = vmatprep.subr.bf16.mxu0 %v2810
    %3064 = vmatpush1.bf16.msra.mxu0 %v2809
    %3065 = vmatprep.subr.bf16.mxu0 %v2814
    %3066 = vmatpush1.bf16.msra.mxu0 %v2813
    %3067 = vmatprep.subr.bf16.mxu0 %v2818
    %3068 = vmatpush1.bf16.msra.mxu0 %v2817
    %3069 = vmatprep.subr.bf16.mxu0 %v2822
    %3070 = vmatpush1.bf16.msra.mxu0 %v2821
    %3071 = vmatprep.subr.bf16.mxu0 %v2826
    %3072 = vmatpush1.bf16.msra.mxu0 %v2825
    %3073 = vmatprep.subr.bf16.mxu0 %v2830
    %3074 = vmatpush1.bf16.msra.mxu0 %v2829
    %3075 = vmatprep.subr.bf16.mxu0 %v2834
    %3076 = vmatpush1.bf16.msra.mxu0 %v2833
    %3077 = vmatprep.subr.bf16.mxu0 %v2838
    %3078 = vmatpush1.bf16.msra.mxu0 %v2837
    %3079 = vmatprep.subr.bf16.mxu0 %v2842
    %3080 = vmatpush1.bf16.msra.mxu0 %v2841
    %3081 = vmatprep.subr.bf16.mxu0 %v2846
    %3082 = vmatpush1.bf16.msra.mxu0 %v2845
    %3083 = vmatprep.subr.bf16.mxu0 %v2850
    %3084 = vmatpush1.bf16.msra.mxu0 %v2849
    %3085 = vmatprep.subr.bf16.mxu0 %v2854
    %3086 = vmatpush1.bf16.msra.mxu0 %v2853
    %3087 = vmatprep.subr.bf16.mxu0 %v2858
    %3088 = vmatpush1.bf16.msra.mxu0 %v2857
    %3089 = vmatprep.subr.bf16.mxu0 %v2862
    %3090 = vmatpush1.bf16.msra.mxu0 %v2861
    %3091 = vmatprep.subr.bf16.mxu0 %v2866
    %3092 = vmatpush1.bf16.msra.mxu0 %v2865
    %3093 = vmatprep.mubr.bf16.mxu0 %v2268
    %3094 = vmatmul.mubr.bf16.gmra.mrb[0].mxu0 %v2267
    %v3095 = vpop.f32.mrb[0].mxu0
    %v3096 = vadd.f32 %v2404, %v3095
    %v3097 = vpop.f32.mrb[0].mxu0
    %v3098 = vadd.f32 %v2408, %v3097
    %v3099 = vpop.f32.mrb[0].mxu0
    %v3100 = vadd.f32 %v2404, %v3099
    %v3101 = vpop.f32.mrb[0].mxu0
    %v3102 = vadd.f32 %v2408, %v3101
    %3103 = vdwg.mxu0
    %3104 = vmatprep.subr.bf16.mxu0 %v2870
    %3105 = vmatpush1.bf16.msra.mxu0 %v2869
    %3106 = vmatprep.subr.bf16.mxu0 %v2874
    %3107 = vmatpush1.bf16.msra.mxu0 %v2873
    %3108 = vmatprep.subr.bf16.mxu0 %v2878
    %3109 = vmatpush1.bf16.msra.mxu0 %v2877
    %3110 = vmatprep.subr.bf16.mxu0 %v2882
    %3111 = vmatpush1.bf16.msra.mxu0 %v2881
    %3112 = vmatprep.subr.bf16.mxu0 %v2886
    %3113 = vmatpush1.bf16.msra.mxu0 %v2885
    %3114 = vmatprep.subr.bf16.mxu0 %v2890
    %3115 = vmatpush1.bf16.msra.mxu0 %v2889
    %3116 = vmatprep.subr.bf16.mxu0 %v2894
    %3117 = vmatpush1.bf16.msra.mxu0 %v2893
    %3118 = vmatprep.subr.bf16.mxu0 %v2898
    %3119 = vmatpush1.bf16.msra.mxu0 %v2897
    %3120 = vmatprep.subr.bf16.mxu0 %v2902
    %3121 = vmatpush1.bf16.msra.mxu0 %v2901
    %3122 = vmatprep.subr.bf16.mxu0 %v2906
    %3123 = vmatpush1.bf16.msra.mxu0 %v2905
    %3124 = vmatprep.subr.bf16.mxu0 %v2910
    %3125 = vmatpush1.bf16.msra.mxu0 %v2909
    %3126 = vmatprep.subr.bf16.mxu0 %v2914
    %3127 = vmatpush1.bf16.msra.mxu0 %v2913
    %3128 = vmatprep.subr.bf16.mxu0 %v2918
    %3129 = vmatpush1.bf16.msra.mxu0 %v2917
    %3130 = vmatprep.subr.bf16.mxu0 %v2922
    %3131 = vmatpush1.bf16.msra.mxu0 %v2921
    %3132 = vmatprep.subr.bf16.mxu0 %v2926
    %3133 = vmatpush1.bf16.msra.mxu0 %v2925
    %3134 = vmatprep.subr.bf16.mxu0 %v2930
    %3135 = vmatpush1.bf16.msra.mxu0 %v2929
    %3136 = vmatprep.mubr.bf16.mxu0 %v2270
    %3137 = vmatmul.mubr.bf16.gmra.mrb[0].mxu0 %v2269
    %v3138 = vpop.f32.mrb[0].mxu0
    %v3139 = vadd.f32 %v3096, %v3138
    %v3140 = vpop.f32.mrb[0].mxu0
    %v3141 = vadd.f32 %v3098, %v3140
    %v3142 = vpop.f32.mrb[0].mxu0
    %v3143 = vadd.f32 %v3100, %v3142
    %v3144 = vpop.f32.mrb[0].mxu0
    %v3145 = vadd.f32 %v3102, %v3144
    %3146 = vdwg.mxu0
    %3147 = vmatprep.subr.bf16.mxu0 %v2808
    %3148 = vmatpush1.bf16.msra.mxu0 %v2807
    %3149 = vmatprep.subr.bf16.mxu0 %v2812
    %3150 = vmatpush1.bf16.msra.mxu0 %v2811
    %3151 = vmatprep.subr.bf16.mxu0 %v2816
    %3152 = vmatpush1.bf16.msra.mxu0 %v2815
    %3153 = vmatprep.subr.bf16.mxu0 %v2820
    %3154 = vmatpush1.bf16.msra.mxu0 %v2819
    %3155 = vmatprep.subr.bf16.mxu0 %v2824
    %3156 = vmatpush1.bf16.msra.mxu0 %v2823
    %3157 = vmatprep.subr.bf16.mxu0 %v2828
    %3158 = vmatpush1.bf16.msra.mxu0 %v2827
    %3159 = vmatprep.subr.bf16.mxu0 %v2832
    %3160 = vmatpush1.bf16.msra.mxu0 %v2831
    %3161 = vmatprep.subr.bf16.mxu0 %v2836
    %3162 = vmatpush1.bf16.msra.mxu0 %v2835
    %3163 = vmatprep.subr.bf16.mxu0 %v2840
    %3164 = vmatpush1.bf16.msra.mxu0 %v2839
    %3165 = vmatprep.subr.bf16.mxu0 %v2844
    %3166 = vmatpush1.bf16.msra.mxu0 %v2843
    %3167 = vmatprep.subr.bf16.mxu0 %v2848
    %3168 = vmatpush1.bf16.msra.mxu0 %v2847
    %3169 = vmatprep.subr.bf16.mxu0 %v2852
    %3170 = vmatpush1.bf16.msra.mxu0 %v2851
    %3171 = vmatprep.subr.bf16.mxu0 %v2856
    %3172 = vmatpush1.bf16.msra.mxu0 %v2855
    %3173 = vmatprep.subr.bf16.mxu0 %v2860
    %3174 = vmatpush1.bf16.msra.mxu0 %v2859
    %3175 = vmatprep.subr.bf16.mxu0 %v2864
    %3176 = vmatpush1.bf16.msra.mxu0 %v2863
    %3177 = vmatprep.subr.bf16.mxu0 %v2868
    %3178 = vmatpush1.bf16.msra.mxu0 %v2867
    %3179 = vmatprep.mubr.bf16.mxu0 %v2268
    %3180 = vmatmul.mubr.bf16.gmra.mrb[0].mxu0 %v2267
    %v3181 = vpop.f32.mrb[0].mxu0
    %v3182 = vadd.f32 %v2412, %v3181
    %v3183 = vpop.f32.mrb[0].mxu0
    %v3184 = vadd.f32 %v2416, %v3183
    %v3185 = vpop.f32.mrb[0].mxu0
    %v3186 = vadd.f32 %v2412, %v3185
    %v3187 = vpop.f32.mrb[0].mxu0
    %v3188 = vadd.f32 %v2416, %v3187
    %3189 = vdwg.mxu0
    %3190 = vmatprep.subr.bf16.mxu0 %v2872
    %3191 = vmatpush1.bf16.msra.mxu0 %v2871
    %3192 = vmatprep.subr.bf16.mxu0 %v2876
    %3193 = vmatpush1.bf16.msra.mxu0 %v2875
    %3194 = vmatprep.subr.bf16.mxu0 %v2880
    %3195 = vmatpush1.bf16.msra.mxu0 %v2879
    %3196 = vmatprep.subr.bf16.mxu0 %v2884
    %3197 = vmatpush1.bf16.msra.mxu0 %v2883
    %3198 = vmatprep.subr.bf16.mxu0 %v2888
    %3199 = vmatpush1.bf16.msra.mxu0 %v2887
    %3200 = vmatprep.subr.bf16.mxu0 %v2892
    %3201 = vmatpush1.bf16.msra.mxu0 %v2891
    %3202 = vmatprep.subr.bf16.mxu0 %v2896
    %3203 = vmatpush1.bf16.msra.mxu0 %v2895
    %3204 = vmatprep.subr.bf16.mxu0 %v2900
    %3205 = vmatpush1.bf16.msra.mxu0 %v2899
    %3206 = vmatprep.subr.bf16.mxu0 %v2904
    %3207 = vmatpush1.bf16.msra.mxu0 %v2903
    %3208 = vmatprep.subr.bf16.mxu0 %v2908
    %3209 = vmatpush1.bf16.msra.mxu0 %v2907
    %3210 = vmatprep.subr.bf16.mxu0 %v2912
    %3211 = vmatpush1.bf16.msra.mxu0 %v2911
    %3212 = vmatprep.subr.bf16.mxu0 %v2916
    %3213 = vmatpush1.bf16.msra.mxu0 %v2915
    %3214 = vmatprep.subr.bf16.mxu0 %v2920
    %3215 = vmatpush1.bf16.msra.mxu0 %v2919
    %3216 = vmatprep.subr.bf16.mxu0 %v2924
    %3217 = vmatpush1.bf16.msra.mxu0 %v2923
    %3218 = vmatprep.subr.bf16.mxu0 %v2928
    %3219 = vmatpush1.bf16.msra.mxu0 %v2927
    %3220 = vmatprep.subr.bf16.mxu0 %v2932
    %3221 = vmatpush1.bf16.msra.mxu0 %v2931
    %3222 = vmatprep.mubr.bf16.mxu0 %v2270
    %3223 = vmatmul.mubr.bf16.gmra.mrb[0].mxu0 %v2269
    %v3224 = vpop.f32.mrb[0].mxu0
    %v3225 = vadd.f32 %v3182, %v3224
    %v3226 = vpop.f32.mrb[0].mxu0
    %v3227 = vadd.f32 %v3184, %v3226
    %v3228 = vpop.f32.mrb[0].mxu0
    %v3229 = vadd.f32 %v3186, %v3228
    %v3230 = vpop.f32.mrb[0].mxu0
    %v3231 = vadd.f32 %v3188, %v3230
    %3232 = vdwg.mxu0
    %v3233 = vmax.f32 %v3139, 0.0
    %v3234 = vmax.f32 %v3141, 0.0
    %v3235 = vmax.f32 %v3225, 0.0
    %v3236 = vmax.f32 %v3227, 0.0
    %v3237 = vmax.f32 %v3143, 0.0
    %v3238 = vmax.f32 %v3145, 0.0
    %v3239 = vmax.f32 %v3229, 0.0
    %v3240 = vmax.f32 %v3231, 0.0
    %v3241 = vld [vmem:[%s9] sm:$0xf]
    %v3242 = vunpack.c.l.bf16 %v3241
    %v3244 = vlaneseq
    %v3245 = vshrl.u32 %v3244, 7
    %v3246 = vsub.s32 0, %v3245
    %v3247 = vrot.slane %v3242, %v3246
    %v3248 = vlaneseq
    %v3249 = vshrl.u32 %v3248, 7
    %v3250 = vsub.s32 2, %v3249
    %v3251 = vrot.slane %v3242, %v3250
    %v3252 = vlaneseq
    %v3253 = vshrl.u32 %v3252, 7
    %v3254 = vsub.s32 4, %v3253
    %v3255 = vrot.slane %v3242, %v3254
    %v3256 = vlaneseq
    %v3257 = vshrl.u32 %v3256, 7
    %v3258 = vsub.s32 6, %v3257
    %v3259 = vrot.slane %v3242, %v3258
    %v3264 = vlaneseq
    %v3265 = vshrl.u32 %v3264, 7
    %v3266 = vsub.s32 0, %v3265
    %v3267 = vrot.slane %v3247, %v3266
    %v3268 = vlaneseq
    %v3269 = vshrl.u32 %v3268, 7
    %v3270 = vsub.s32 0, %v3269
    %v3271 = vrot.slane %v3251, %v3270
    %v3272 = vlaneseq
    %v3273 = vshrl.u32 %v3272, 7
    %v3274 = vsub.s32 0, %v3273
    %v3275 = vrot.slane %v3255, %v3274
    %v3276 = vlaneseq
    %v3277 = vshrl.u32 %v3276, 7
    %v3278 = vsub.s32 0, %v3277
    %v3279 = vrot.slane %v3259, %v3278
    %v3280 = vmul.f32 %v3233, %v3267
    %v3281 = vmul.f32 %v3234, %v3271
    %v3282 = vmul.f32 %v3235, %v3275
    %v3283 = vmul.f32 %v3236, %v3279
    %v3284 = vmul.f32 %v3237, %v3267
    %v3285 = vmul.f32 %v3238, %v3271
    %v3286 = vmul.f32 %v3239, %v3275
    %v3287 = vmul.f32 %v3240, %v3279
    %v3288 = vadd.f32 %v3280, %v3281
    %v3289 = vadd.f32 %v3288, %v3282
    %v3290 = vadd.f32 %v3289, %v3283
    %3291 = vadd.xlane.f32.xlu0 %v3290
    %v3292 = vpop.xlane.xlu0 %3291
    %v3293 = vadd.f32 %v3284, %v3285
    %v3294 = vadd.f32 %v3293, %v3286
    %v3295 = vadd.f32 %v3294, %v3287
    %3296 = vadd.xlane.f32.xlu0 %v3295
    %v3297 = vpop.xlane.xlu0 %3296
    %v3298 = vld [vmem:[#allocation2] sm:$0x1]
    %v3300 = vlaneseq
    %v3301 = vshrl.u32 %v3300, 7
    %v3302 = vsub.s32 0, %v3301
    %v3303 = vrot.slane %v3298, %v3302
    %v3305 = vadd.f32 %v3292, %v3303
    %v3306 = vadd.f32 %v3297, %v3303
    %v3307 = vsub.f32 0.0, %v3305
    %v3308 = vsub.f32 0.0, %v3306
    %v3309 = vmul.f32 %v3307, 1.442695
    %v3310 = vpow.pop %v3309
    %v3311 = vmul.f32 %v3308, 1.442695
    %v3312 = vpow.pop %v3311
    %v3313 = vadd.f32 %v3310, 1.0
    %v3314 = vadd.f32 %v3312, 1.0
    %v3315 = vrcp.pop %v3313
    %v3316 = vrcp.pop %v3314
    %vm3317 = vcmask 7168
    %3318 = vst.msk [vmem:[%s11] sm:$0xff] %vm3317, %v3315
    %3319 = vst.msk [vmem:[%s11 + $0x8] sm:$0xff] %vm3317, %v3316
    // Predicated region
    $region62: #{discriminator_forward.1} parent=1 // pred_check
      _
    $region63: #{discriminator_forward.1} parent=1 // pred_check_branch
      %3321 = sbr.rel (0) target = $region65
    $region64: #{discriminator_forward.1} parent=1 // pred_region
      _
    $region65: #{discriminator_forward.1} parent=1 // pred_fallthru
      _
    // Predicated region
    $region66: #{discriminator_forward.1} parent=1 // pred_check
      _
    $region67: #{discriminator_forward.1} parent=1 // pred_check_branch
      %3323 = sbr.rel (0) target = $region69
    $region68: #{discriminator_forward.1} parent=1 // pred_region
      _
    $region69: #{discriminator_forward.1} parent=1 // pred_fallthru
      _
    %3324 = vsyncpa [#allocation4], 1
    %3325 = vsyncpa [#allocation6], 1
    %3326 = vsyncpa [#allocation9], 1

</llo_original>
